<compile_context>
chip_gen: v7x
topology: tpu7x:2x2x1
jax: 0.10.0
libtpu: 0.0.40
codegen_flags: <defaults>
</compile_context>

<pallas_src>
import jax
import jax.numpy as jnp
from jax import lax
from jax.experimental import pallas as pl
from jax.experimental.pallas import tpu as pltpu


def _round_up(n, m):
    return ((n + m - 1) // m) * m


def _vpu_supports_bf16():
    """v6e/v7x VALUs are bf16-capable; v5e and earlier are not."""
    try:
        kind = jax.devices()[0].device_kind.lower()
    except Exception:
        return False
    return ("v6" in kind) or ("v7" in kind) or ("7x" in kind)


def _mlp_kernel(x_ref, w1_ref, b1_ref, w2_ref, b2_ref, w3_ref, b3_ref,
                w4_ref, b4_ref, o_ref):
    """Fused 4-layer MLP for one (bm, D) row tile.

    fc1..fc3: bf16 MXU inputs, f32 accumulation; bias+ReLU in the bias dtype
    (bf16 on v6e/v7x, f32 on v5e).  fc4: MXU with transposed rhs producing a
    lane-dense (1, bm) row directly.
    """
    ew = b1_ref.dtype  # elementwise dtype chosen at prepare_params() time

    # fc1: (bm, D) @ (D, 512), f32 accumulate.  x arrives f32, cast on VPU.
    h = jnp.dot(x_ref[...].astype(jnp.bfloat16), w1_ref[...],
                preferred_element_type=jnp.float32)
    h = jnp.maximum(h.astype(ew) + b1_ref[...], 0).astype(jnp.bfloat16)

    # fc2: (bm, 512) @ (512, 128)
    h = jnp.dot(h, w2_ref[...], preferred_element_type=jnp.float32)
    h = jnp.maximum(h.astype(ew) + b2_ref[...], 0).astype(jnp.bfloat16)

    # fc3: (bm, 128) @ (128, 32)
    h = jnp.dot(h, w3_ref[...], preferred_element_type=jnp.float32)
    h = jnp.maximum(h.astype(ew) + b3_ref[...], 0)

    # fc4: (1, 32) x (bm, 32) contracted over k -> (1, bm), lane-dense.
    # Kept in f32 (tiny K=32 matmul) for final-layer precision.
    out = lax.dot_general(
        w4_ref[...], h.astype(jnp.float32),
        dimension_numbers=(((1,), (1,)), ((), ())),
        preferred_element_type=jnp.float32) + b4_ref[...]
    o_ref[...] = out.astype(o_ref.dtype)


def init_params(key, input_dim):
    """PyTorch-style (Kaiming-uniform-ish) Linear init, f32 master copy."""
    dims = [(input_dim, 512), (512, 128), (128, 32), (32, 1)]
    params = []
    for fan_in, fan_out in dims:
        key, kw, kb = jax.random.split(key, 3)
        bound = 1.0 / jnp.sqrt(fan_in)
        w = jax.random.uniform(kw, (fan_in, fan_out), jnp.float32, -bound, bound)
        b = jax.random.uniform(kb, (1, fan_out), jnp.float32, -bound, bound)
        params.append((w, b))
    return params


def prepare_params(params):
    """One-time (outside-jit) cast/layout of the weights for the kernel.

    w1..w3 -> bf16 (MXU inputs, halves DMA bytes); biases -> bf16 on
    v6e/v7x (bf16 VPU epilogue) else f32; w4 stored as an f32 (1, 32) row.
    """
    ew = jnp.bfloat16 if _vpu_supports_bf16() else jnp.float32
    (w1, b1), (w2, b2), (w3, b3), (w4, b4) = params
    return dict(
        w1=w1.astype(jnp.bfloat16), b1=b1.astype(ew),
        w2=w2.astype(jnp.bfloat16), b2=b2.astype(ew),
        w3=w3.astype(jnp.bfloat16), b3=b3.astype(ew),
        w4=w4.reshape(1, -1).astype(jnp.float32),       # (1, 32)
        b4=b4.reshape(1, 1).astype(jnp.float32),        # (1, 1)
    )


def muon_classifier_forward(x, p, *, bm=None):
    """x: (B, D) float32, p: prepare_params() output. Returns (B, 1) f32 logits."""
    B, D = x.shape

    if bm is None:
        if B <= 512:
            bm = max(8, _round_up(B, 8))     # single grid step
        else:
            bm = 256                          # 256-wide MXU tile, 128-multiple
    pad = (-B) % bm
    xp = jnp.pad(x, ((0, pad), (0, 0))) if pad else x
    Bp = B + pad

    full = lambda a: pl.BlockSpec(a.shape, lambda i: (0,) * a.ndim)

    out = pl.pallas_call(
        _mlp_kernel,
        out_shape=jax.ShapeDtypeStruct((1, Bp), jnp.float32),
        grid_spec=pltpu.PrefetchScalarGridSpec(
            num_scalar_prefetch=0,
            grid=(Bp // bm,),
            in_specs=[
                pl.BlockSpec((bm, D), lambda i: (i, 0)),   # x row tile (f32)
                full(p["w1"]), full(p["b1"]),              # fc1
                full(p["w2"]), full(p["b2"]),              # fc2
                full(p["w3"]), full(p["b3"]),              # fc3
                full(p["w4"]), full(p["b4"]),              # fc4
            ],
            # Lane-dense output: (1, bm) row per step of an (1, Bp) array.
            out_specs=pl.BlockSpec((1, bm), lambda i: (0, i)),
        ),
        compiler_params=pltpu.CompilerParams(
            dimension_semantics=("parallel",),   # shards row tiles on v7x when grid > 1
            vmem_limit_bytes=32 * 1024 * 1024,   # fits v7x's 64 MiB with ample headroom
        ),
    )(xp, p["w1"], p["b1"], p["w2"], p["b2"], p["w3"], p["b3"], p["w4"], p["b4"])

    return out[0, :B, None]                      # (1, Bp) -> (B, 1)


def reference_forward(x, p):
    """Pure-JAX reference mirroring the kernel's dtypes exactly."""
    ew = p["b1"].dtype
    h = jnp.dot(x.astype(jnp.bfloat16), p["w1"], preferred_element_type=jnp.float32)
    h = jnp.maximum(h.astype(ew) + p["b1"], 0).astype(jnp.bfloat16)
    h = jnp.dot(h, p["w2"], preferred_element_type=jnp.float32)
    h = jnp.maximum(h.astype(ew) + p["b2"], 0).astype(jnp.bfloat16)
    h = jnp.dot(h, p["w3"], preferred_element_type=jnp.float32)
    h = jnp.maximum(h.astype(ew) + p["b3"], 0)
    out = jnp.dot(h.astype(jnp.float32), p["w4"].T,
                  preferred_element_type=jnp.float32) + p["b4"]
    return out  # (B, 1)


if __name__ == "__main__":
    key = jax.random.PRNGKey(0)
    k_x, k_p = jax.random.split(key)

    BATCH, INPUT_DIM = 256, 64        # single grid step (bm = 256), no padding
    x = jax.random.normal(k_x, (BATCH, INPUT_DIM), jnp.float32)
    params = prepare_params(init_params(k_p, INPUT_DIM))   # one-time casts, outside jit

    fwd = jax.jit(muon_classifier_forward)
    out = jax.block_until_ready(fwd(x, params))

    ref = reference_forward(x, params)
    assert out.shape == (BATCH, 1)
    # bf16 matmul inputs (f32 accumulation) -> tolerance looser than pure-f32.
    assert jnp.allclose(out, ref, atol=1e-2, rtol=1e-2), "mismatch vs reference"

    print("KERNEL_OK")
</pallas_src>

<mosaic_0001>
module attributes {stable_mosaic.version = 11 : i64} {
  func.func @_mlp_kernel(%arg0: i32, %arg1: memref<256x64xf32, #tpu.memory_space<vmem>>, %arg2: memref<64x512xbf16, #tpu.memory_space<vmem>>, %arg3: memref<1x512xf32, #tpu.memory_space<vmem>>, %arg4: memref<512x128xbf16, #tpu.memory_space<vmem>>, %arg5: memref<1x128xf32, #tpu.memory_space<vmem>>, %arg6: memref<128x32xbf16, #tpu.memory_space<vmem>>, %arg7: memref<1x32xf32, #tpu.memory_space<vmem>>, %arg8: memref<1x32xf32, #tpu.memory_space<vmem>>, %arg9: memref<1x1xf32, #tpu.memory_space<vmem>>, %arg10: memref<1x256xf32, #tpu.memory_space<vmem>>) attributes {dimension_semantics = [#tpu.dimension_semantics<parallel>], iteration_bounds = array<i64: 1>, scalar_prefetch = 0 : i64, scratch_operands = 0 : i64, tpu.core_type = #tpu.core_type<tc>, window_params = [{transform_indices = @transform_0, window_bounds = array<i64: 256, 64>}, {pipeline_mode = #tpu.pipeline_mode<synchronous>, transform_indices = @transform_1, window_bounds = array<i64: 64, 512>}, {pipeline_mode = #tpu.pipeline_mode<synchronous>, transform_indices = @transform_2, window_bounds = array<i64: 1, 512>}, {pipeline_mode = #tpu.pipeline_mode<synchronous>, transform_indices = @transform_3, window_bounds = array<i64: 512, 128>}, {pipeline_mode = #tpu.pipeline_mode<synchronous>, transform_indices = @transform_4, window_bounds = array<i64: 1, 128>}, {pipeline_mode = #tpu.pipeline_mode<synchronous>, transform_indices = @transform_5, window_bounds = array<i64: 128, 32>}, {pipeline_mode = #tpu.pipeline_mode<synchronous>, transform_indices = @transform_6, window_bounds = array<i64: 1, 32>}, {pipeline_mode = #tpu.pipeline_mode<synchronous>, transform_indices = @transform_7, window_bounds = array<i64: 1, 32>}, {pipeline_mode = #tpu.pipeline_mode<synchronous>, transform_indices = @transform_8, window_bounds = array<i64: 1, 1>}, {transform_indices = @transform_9, window_bounds = array<i64: 1, 256>}]} {
    %c0 = arith.constant 0 : index
    %c0_0 = arith.constant 0 : index
    %0 = vector.load %arg1[%c0, %c0_0] : memref<256x64xf32, #tpu.memory_space<vmem>>, vector<256x64xf32>
    %1 = arith.truncf %0 : vector<256x64xf32> to vector<256x64xbf16>
    %c0_1 = arith.constant 0 : index
    %c0_2 = arith.constant 0 : index
    %2 = vector.load %arg2[%c0_1, %c0_2] : memref<64x512xbf16, #tpu.memory_space<vmem>>, vector<64x512xbf16>
    %cst = arith.constant dense<0.000000e+00> : vector<256x512xf32>
    %3 = tpu.matmul %1, %2, %cst {dimension_numbers = #tpu.dot_dimension_numbers<[1], [0], [0], [1], [0, 0, 1, 1], [], []>} : vector<256x64xbf16>, vector<64x512xbf16>, vector<256x512xf32> -> vector<256x512xf32>
    %c0_3 = arith.constant 0 : index
    %c0_4 = arith.constant 0 : index
    %4 = vector.load %arg3[%c0_3, %c0_4] : memref<1x512xf32, #tpu.memory_space<vmem>>, vector<1x512xf32>
    %5 = vector.broadcast %4 : vector<1x512xf32> to vector<256x512xf32>
    %6 = arith.addf %3, %5 : vector<256x512xf32>
    %cst_5 = arith.constant 0.000000e+00 : f32
    %7 = vector.broadcast %cst_5 : f32 to vector<256x512xf32>
    %8 = arith.maximumf %6, %7 : vector<256x512xf32>
    %9 = arith.truncf %8 : vector<256x512xf32> to vector<256x512xbf16>
    %c0_6 = arith.constant 0 : index
    %c0_7 = arith.constant 0 : index
    %10 = vector.load %arg4[%c0_6, %c0_7] : memref<512x128xbf16, #tpu.memory_space<vmem>>, vector<512x128xbf16>
    %cst_8 = arith.constant dense<0.000000e+00> : vector<256x128xf32>
    %11 = tpu.matmul %9, %10, %cst_8 {dimension_numbers = #tpu.dot_dimension_numbers<[1], [0], [0], [1], [0, 0, 1, 1], [], []>} : vector<256x512xbf16>, vector<512x128xbf16>, vector<256x128xf32> -> vector<256x128xf32>
    %c0_9 = arith.constant 0 : index
    %c0_10 = arith.constant 0 : index
    %12 = vector.load %arg5[%c0_9, %c0_10] : memref<1x128xf32, #tpu.memory_space<vmem>>, vector<1x128xf32>
    %13 = vector.broadcast %12 : vector<1x128xf32> to vector<256x128xf32>
    %14 = arith.addf %11, %13 : vector<256x128xf32>
    %cst_11 = arith.constant 0.000000e+00 : f32
    %15 = vector.broadcast %cst_11 : f32 to vector<256x128xf32>
    %16 = arith.maximumf %14, %15 : vector<256x128xf32>
    %17 = arith.truncf %16 : vector<256x128xf32> to vector<256x128xbf16>
    %c0_12 = arith.constant 0 : index
    %c0_13 = arith.constant 0 : index
    %18 = vector.load %arg6[%c0_12, %c0_13] : memref<128x32xbf16, #tpu.memory_space<vmem>>, vector<128x32xbf16>
    %cst_14 = arith.constant dense<0.000000e+00> : vector<256x32xf32>
    %19 = tpu.matmul %17, %18, %cst_14 {dimension_numbers = #tpu.dot_dimension_numbers<[1], [0], [0], [1], [0, 0, 1, 1], [], []>} : vector<256x128xbf16>, vector<128x32xbf16>, vector<256x32xf32> -> vector<256x32xf32>
    %c0_15 = arith.constant 0 : index
    %c0_16 = arith.constant 0 : index
    %20 = vector.load %arg7[%c0_15, %c0_16] : memref<1x32xf32, #tpu.memory_space<vmem>>, vector<1x32xf32>
    %21 = vector.broadcast %20 : vector<1x32xf32> to vector<256x32xf32>
    %22 = arith.addf %19, %21 : vector<256x32xf32>
    %cst_17 = arith.constant 0.000000e+00 : f32
    %23 = vector.broadcast %cst_17 : f32 to vector<256x32xf32>
    %24 = arith.maximumf %22, %23 : vector<256x32xf32>
    %c0_18 = arith.constant 0 : index
    %c0_19 = arith.constant 0 : index
    %25 = vector.load %arg8[%c0_18, %c0_19] : memref<1x32xf32, #tpu.memory_space<vmem>>, vector<1x32xf32>
    %cst_20 = arith.constant dense<0.000000e+00> : vector<1x256xf32>
    %26 = tpu.matmul %25, %24, %cst_20 {dimension_numbers = #tpu.dot_dimension_numbers<[1], [1], [0], [0], [0, 0, 1, 0], [], []>} : vector<1x32xf32>, vector<256x32xf32>, vector<1x256xf32> -> vector<1x256xf32>
    %c0_21 = arith.constant 0 : index
    %c0_22 = arith.constant 0 : index
    %27 = vector.load %arg9[%c0_21, %c0_22] : memref<1x1xf32, #tpu.memory_space<vmem>>, vector<1x1xf32>
    %28 = vector.broadcast %27 : vector<1x1xf32> to vector<1x256xf32>
    %29 = arith.addf %26, %28 : vector<1x256xf32>
    %c0_23 = arith.constant 0 : index
    %c0_24 = arith.constant 0 : index
    %30 = vector.load %arg10[%c0_23, %c0_24] : memref<1x256xf32, #tpu.memory_space<vmem>>, vector<1x256xf32>
    tpu.vector_store %arg10[%c0_23, %c0_24], %29 {strides = array<i32>} : memref<1x256xf32, #tpu.memory_space<vmem>>, vector<1x256xf32>,
    return
  }
  func.func @transform_0(%arg0: i32) -> (i32, i32) {
    %c0_i32 = arith.constant 0 : i32
    %c0_i32_0 = arith.constant 0 : i32
    return %arg0, %c0_i32 : i32, i32
  }
  func.func @transform_1(%arg0: i32) -> (i32, i32) {
    %c0_i32 = arith.constant 0 : i32
    %c0_i32_0 = arith.constant 0 : i32
    %c0_i32_1 = arith.constant 0 : i32
    return %c0_i32, %c0_i32_0 : i32, i32
  }
  func.func @transform_2(%arg0: i32) -> (i32, i32) {
    %c0_i32 = arith.constant 0 : i32
    %c0_i32_0 = arith.constant 0 : i32
    %c0_i32_1 = arith.constant 0 : i32
    return %c0_i32, %c0_i32_0 : i32, i32
  }
  func.func @transform_3(%arg0: i32) -> (i32, i32) {
    %c0_i32 = arith.constant 0 : i32
    %c0_i32_0 = arith.constant 0 : i32
    %c0_i32_1 = arith.constant 0 : i32
    return %c0_i32, %c0_i32_0 : i32, i32
  }
  func.func @transform_4(%arg0: i32) -> (i32, i32) {
    %c0_i32 = arith.constant 0 : i32
    %c0_i32_0 = arith.constant 0 : i32
    %c0_i32_1 = arith.constant 0 : i32
    return %c0_i32, %c0_i32_0 : i32, i32
  }
  func.func @transform_5(%arg0: i32) -> (i32, i32) {
    %c0_i32 = arith.constant 0 : i32
    %c0_i32_0 = arith.constant 0 : i32
    %c0_i32_1 = arith.constant 0 : i32
    return %c0_i32, %c0_i32_0 : i32, i32
  }
  func.func @transform_6(%arg0: i32) -> (i32, i32) {
    %c0_i32 = arith.constant 0 : i32
    %c0_i32_0 = arith.constant 0 : i32
    %c0_i32_1 = arith.constant 0 : i32
    return %c0_i32, %c0_i32_0 : i32, i32
  }
  func.func @transform_7(%arg0: i32) -> (i32, i32) {
    %c0_i32 = arith.constant 0 : i32
    %c0_i32_0 = arith.constant 0 : i32
    %c0_i32_1 = arith.constant 0 : i32
    return %c0_i32, %c0_i32_0 : i32, i32
  }
  func.func @transform_8(%arg0: i32) -> (i32, i32) {
    %c0_i32 = arith.constant 0 : i32
    %c0_i32_0 = arith.constant 0 : i32
    %c0_i32_1 = arith.constant 0 : i32
    return %c0_i32, %c0_i32_0 : i32, i32
  }
  func.func @transform_9(%arg0: i32) -> (i32, i32) {
    %c0_i32 = arith.constant 0 : i32
    %c0_i32_0 = arith.constant 0 : i32
    return %c0_i32, %arg0 : i32, i32
  }
}

</mosaic_0001>

<llo_original>
// kernel: muon_classifier_forward.1
$region0: #{muon_classifier_forward.1}
  #allocation0 [shape = 'u32[]', space=smem, size = 0x4, offset = 0x4, fixed_abs, tag = 'smem constant byte address 0x4 - core index']
  #allocation1 [shape = 'u32[144,128]{1,0:T(1,128)}', space=vmem, size = 0x12000, scoped, tag = 'internal scratch']
  #allocation2 [shape = 'f32[1,1]{1,0:T(1,128)S(1)}', space=vmem, size = 0x200, scoped, tag = 'scoped memory for muon_classifier_forward.1']
  %s0 = inlined_call_operand.vmem [shape: f32[256,64], index: 0, kind: input, shape index: {}]
  %s1 = inlined_call_operand.vmem [shape: bf16[64,512], index: 1, kind: input, shape index: {}]
  %s2 = inlined_call_operand.vmem [shape: f32[1,512], index: 2, kind: input, shape index: {}]
  %s3 = inlined_call_operand.vmem [shape: bf16[512,128], index: 3, kind: input, shape index: {}]
  %s4 = inlined_call_operand.vmem [shape: f32[1,128], index: 4, kind: input, shape index: {}]
  %s5 = inlined_call_operand.vmem [shape: bf16[128,32], index: 5, kind: input, shape index: {}]
  %s6 = inlined_call_operand.vmem [shape: f32[1,32], index: 6, kind: input, shape index: {}]
  %s7 = inlined_call_operand.vmem [shape: f32[1,32], index: 7, kind: input, shape index: {}]
  %s8 = inlined_call_operand.<no memory space> [shape: f32[1,1], index: 8, kind: input, shape index: {}]
  %s9 = inlined_call_operand.hbm [shape: f32[1,256], index: 9, kind: output, shape index: {}]
  %s10 = sld [smem:[#allocation0]]
  $region46: #{muon_classifier_forward.1} parent=0
    _
  %s12 = ssub.s32 1, %s10
  %s13 = scalar_select 0, %s12, %s10
  %v14 = vstv %s8
  %15 = vst [vmem:[#allocation2] sm:$0x1] %v14
  $region1: #{muon_classifier_forward.1} parent=0
    #allocation3 [shape = 'u8[1024]{0}', space=vmem, size = 0x400, scoped, tag = 'output window, operand 0, single buffered']
    #allocation4 [shape = 's32[1]{0}', space=sflag, size = 0x4, scoped, tag = 'scoped memory for muon_classifier_forward.1']
    %16 = vsyncpa [#allocation4], 0
    // Predicated region
    $region2: #{muon_classifier_forward.1} parent=1 // pred_check
      _
    $region3: #{muon_classifier_forward.1} parent=1 // pred_check_branch
      %18 = sbr.rel (0) target = $region5
    $region4: #{muon_classifier_forward.1} parent=1 // pred_region
      _
    $region5: #{muon_classifier_forward.1} parent=1 // pred_fallthru
      _
    // Predicated region
    $region6: #{muon_classifier_forward.1} parent=1 // pred_check
      _
    $region7: #{muon_classifier_forward.1} parent=1 // pred_check_branch
      %20 = sbr.rel (0) target = $region9
    $region8: #{muon_classifier_forward.1} parent=1 // pred_region
      _
    $region9: #{muon_classifier_forward.1} parent=1 // pred_fallthru
      _
    // Predicated region
    $region10: #{muon_classifier_forward.1} parent=1 // pred_check
      _
    $region11: #{muon_classifier_forward.1} parent=1 // pred_check_branch
      %22 = sbr.rel (0) target = $region13
    $region12: #{muon_classifier_forward.1} parent=1 // pred_region
      _
    $region13: #{muon_classifier_forward.1} parent=1 // pred_fallthru
      _
    // Predicated region
    $region14: #{muon_classifier_forward.1} parent=1 // pred_check
      _
    $region15: #{muon_classifier_forward.1} parent=1 // pred_check_branch
      %24 = sbr.rel (0) target = $region17
    $region16: #{muon_classifier_forward.1} parent=1 // pred_region
      _
    $region17: #{muon_classifier_forward.1} parent=1 // pred_fallthru
      _
    // Predicated region
    $region18: #{muon_classifier_forward.1} parent=1 // pred_check
      _
    $region19: #{muon_classifier_forward.1} parent=1 // pred_check_branch
      %26 = sbr.rel (0) target = $region21
    $region20: #{muon_classifier_forward.1} parent=1 // pred_region
      _
    $region21: #{muon_classifier_forward.1} parent=1 // pred_fallthru
      _
    // Predicated region
    $region22: #{muon_classifier_forward.1} parent=1 // pred_check
      _
    $region23: #{muon_classifier_forward.1} parent=1 // pred_check_branch
      %28 = sbr.rel (0) target = $region25
    $region24: #{muon_classifier_forward.1} parent=1 // pred_region
      _
    $region25: #{muon_classifier_forward.1} parent=1 // pred_fallthru
      _
    // Predicated region
    $region26: #{muon_classifier_forward.1} parent=1 // pred_check
      _
    $region27: #{muon_classifier_forward.1} parent=1 // pred_check_branch
      %30 = sbr.rel (0) target = $region29
    $region28: #{muon_classifier_forward.1} parent=1 // pred_region
      _
    $region29: #{muon_classifier_forward.1} parent=1 // pred_fallthru
      _
    // Predicated region
    $region30: #{muon_classifier_forward.1} parent=1 // pred_check
      _
    $region31: #{muon_classifier_forward.1} parent=1 // pred_check_branch
      %32 = sbr.rel (0) target = $region33
    $region32: #{muon_classifier_forward.1} parent=1 // pred_region
      _
    $region33: #{muon_classifier_forward.1} parent=1 // pred_fallthru
      _
    // Predicated region
    $region34: #{muon_classifier_forward.1} parent=1 // pred_check
      _
    $region35: #{muon_classifier_forward.1} parent=1 // pred_check_branch
      %34 = sbr.rel (0) target = $region37
    $region36: #{muon_classifier_forward.1} parent=1 // pred_region
      _
    $region37: #{muon_classifier_forward.1} parent=1 // pred_fallthru
      _
    %v36 = vld [vmem:[%s0] sm:$0xff]
    %v37 = vld [vmem:[%s0 + $0x8] sm:$0xff]
    %v38 = vld [vmem:[%s0 + $0x10] sm:$0xff]
    %v39 = vld [vmem:[%s0 + $0x18] sm:$0xff]
    %v40 = vld [vmem:[%s0 + $0x20] sm:$0xff]
    %v41 = vld [vmem:[%s0 + $0x28] sm:$0xff]
    %v42 = vld [vmem:[%s0 + $0x30] sm:$0xff]
    %v43 = vld [vmem:[%s0 + $0x38] sm:$0xff]
    %v44 = vld [vmem:[%s0 + $0x40] sm:$0xff]
    %v45 = vld [vmem:[%s0 + $0x48] sm:$0xff]
    %v46 = vld [vmem:[%s0 + $0x50] sm:$0xff]
    %v47 = vld [vmem:[%s0 + $0x58] sm:$0xff]
    %v48 = vld [vmem:[%s0 + $0x60] sm:$0xff]
    %v49 = vld [vmem:[%s0 + $0x68] sm:$0xff]
    %v50 = vld [vmem:[%s0 + $0x70] sm:$0xff]
    %v51 = vld [vmem:[%s0 + $0x78] sm:$0xff]
    %v52 = vld [vmem:[%s0 + $0x80] sm:$0xff]
    %v53 = vld [vmem:[%s0 + $0x88] sm:$0xff]
    %v54 = vld [vmem:[%s0 + $0x90] sm:$0xff]
    %v55 = vld [vmem:[%s0 + $0x98] sm:$0xff]
    %v56 = vld [vmem:[%s0 + $0xa0] sm:$0xff]
    %v57 = vld [vmem:[%s0 + $0xa8] sm:$0xff]
    %v58 = vld [vmem:[%s0 + $0xb0] sm:$0xff]
    %v59 = vld [vmem:[%s0 + $0xb8] sm:$0xff]
    %v60 = vld [vmem:[%s0 + $0xc0] sm:$0xff]
    %v61 = vld [vmem:[%s0 + $0xc8] sm:$0xff]
    %v62 = vld [vmem:[%s0 + $0xd0] sm:$0xff]
    %v63 = vld [vmem:[%s0 + $0xd8] sm:$0xff]
    %v64 = vld [vmem:[%s0 + $0xe0] sm:$0xff]
    %v65 = vld [vmem:[%s0 + $0xe8] sm:$0xff]
    %v66 = vld [vmem:[%s0 + $0xf0] sm:$0xff]
    %v67 = vld [vmem:[%s0 + $0xf8] sm:$0xff]
    %v68 = vpack.c.bf16 %v37, %v36
    %v69 = vpack.c.bf16 %v39, %v38
    %v70 = vpack.c.bf16 %v41, %v40
    %v71 = vpack.c.bf16 %v43, %v42
    %v72 = vpack.c.bf16 %v45, %v44
    %v73 = vpack.c.bf16 %v47, %v46
    %v74 = vpack.c.bf16 %v49, %v48
    %v75 = vpack.c.bf16 %v51, %v50
    %v76 = vpack.c.bf16 %v53, %v52
    %v77 = vpack.c.bf16 %v55, %v54
    %v78 = vpack.c.bf16 %v57, %v56
    %v79 = vpack.c.bf16 %v59, %v58
    %v80 = vpack.c.bf16 %v61, %v60
    %v81 = vpack.c.bf16 %v63, %v62
    %v82 = vpack.c.bf16 %v65, %v64
    %v83 = vpack.c.bf16 %v67, %v66
    %v84 = vld [vmem:[%s1] sm:$0xff]
    %v85 = vld [vmem:[%s1 + $0x8] sm:$0xff]
    %v86 = vld [vmem:[%s1 + $0x10] sm:$0xff]
    %v87 = vld [vmem:[%s1 + $0x18] sm:$0xff]
    %v88 = vld [vmem:[%s1 + $0x20] sm:$0xff]
    %v89 = vld [vmem:[%s1 + $0x28] sm:$0xff]
    %v90 = vld [vmem:[%s1 + $0x30] sm:$0xff]
    %v91 = vld [vmem:[%s1 + $0x38] sm:$0xff]
    %v92 = vld [vmem:[%s1 + $0x40] sm:$0xff]
    %v93 = vld [vmem:[%s1 + $0x48] sm:$0xff]
    %v94 = vld [vmem:[%s1 + $0x50] sm:$0xff]
    %v95 = vld [vmem:[%s1 + $0x58] sm:$0xff]
    %v96 = vld [vmem:[%s1 + $0x60] sm:$0xff]
    %v97 = vld [vmem:[%s1 + $0x68] sm:$0xff]
    %v98 = vld [vmem:[%s1 + $0x70] sm:$0xff]
    %v99 = vld [vmem:[%s1 + $0x78] sm:$0xff]
    %v100 = vld [vmem:[%s2] sm:$0xf]
    %v102 = vlaneseq
    %v103 = vshrl.u32 %v102, 7
    %v104 = vsub.s32 0, %v103
    %v105 = vrot.slane %v100, %v104
    %v106 = vlaneseq
    %v107 = vshrl.u32 %v106, 7
    %v108 = vsub.s32 1, %v107
    %v109 = vrot.slane %v100, %v108
    %v110 = vlaneseq
    %v111 = vshrl.u32 %v110, 7
    %v112 = vsub.s32 2, %v111
    %v113 = vrot.slane %v100, %v112
    %v114 = vlaneseq
    %v115 = vshrl.u32 %v114, 7
    %v116 = vsub.s32 3, %v115
    %v117 = vrot.slane %v100, %v116
    %v138 = vunpack.c.l.b16 %v84
    %v139 = vunpack.c.h.b16 %v84
    %v140 = vunpack.c.l.b16 %v85
    %v141 = vunpack.c.h.b16 %v85
    %v142 = vunpack.c.l.b16 %v86
    %v143 = vunpack.c.h.b16 %v86
    %v144 = vunpack.c.l.b16 %v87
    %v145 = vunpack.c.h.b16 %v87
    %v146 = vunpack.c.l.b16 %v88
    %v147 = vunpack.c.h.b16 %v88
    %v148 = vunpack.c.l.b16 %v89
    %v149 = vunpack.c.h.b16 %v89
    %v150 = vunpack.c.l.b16 %v90
    %v151 = vunpack.c.h.b16 %v90
    %v152 = vunpack.c.l.b16 %v91
    %v153 = vunpack.c.h.b16 %v91
    %v154 = vunpack.c.l.b16 %v92
    %v155 = vunpack.c.h.b16 %v92
    %v156 = vunpack.c.l.b16 %v93
    %v157 = vunpack.c.h.b16 %v93
    %v158 = vunpack.c.l.b16 %v94
    %v159 = vunpack.c.h.b16 %v94
    %v160 = vunpack.c.l.b16 %v95
    %v161 = vunpack.c.h.b16 %v95
    %v162 = vunpack.c.l.b16 %v96
    %v163 = vunpack.c.h.b16 %v96
    %v164 = vunpack.c.l.b16 %v97
    %v165 = vunpack.c.h.b16 %v97
    %v166 = vunpack.c.l.b16 %v98
    %v167 = vunpack.c.h.b16 %v98
    %v168 = vunpack.c.l.b16 %v99
    %v169 = vunpack.c.h.b16 %v99
    %v170 = vpack.c.b16 %v142, %v138
    %v171 = vpack.c.b16 %v143, %v139
    %v172 = vpack.c.b16 %v144, %v140
    %v173 = vpack.c.b16 %v145, %v141
    %v174 = vpack.c.b16 %v150, %v146
    %v175 = vpack.c.b16 %v151, %v147
    %v176 = vpack.c.b16 %v152, %v148
    %v177 = vpack.c.b16 %v153, %v149
    %v178 = vpack.c.b16 %v158, %v154
    %v179 = vpack.c.b16 %v159, %v155
    %v180 = vpack.c.b16 %v160, %v156
    %v181 = vpack.c.b16 %v161, %v157
    %v182 = vpack.c.b16 %v166, %v162
    %v183 = vpack.c.b16 %v167, %v163
    %v184 = vpack.c.b16 %v168, %v164
    %v185 = vpack.c.b16 %v169, %v165
    %vm202 = vcmask 523264
    %v204 = vsel %vm202, %v68, 0
    %v207 = vsel %vm202, %v69, 0
    %v210 = vsel %vm202, %v70, 0
    %v213 = vsel %vm202, %v71, 0
    %v216 = vsel %vm202, %v72, 0
    %v219 = vsel %vm202, %v73, 0
    %v222 = vsel %vm202, %v74, 0
    %v225 = vsel %vm202, %v75, 0
    %v228 = vsel %vm202, %v76, 0
    %v231 = vsel %vm202, %v77, 0
    %v234 = vsel %vm202, %v78, 0
    %v237 = vsel %vm202, %v79, 0
    %v240 = vsel %vm202, %v80, 0
    %v243 = vsel %vm202, %v81, 0
    %v246 = vsel %vm202, %v82, 0
    %v249 = vsel %vm202, %v83, 0
    %251 = vmatprep.subr.bf16.mxu0 %v171
    %252 = vmatpush1.bf16.msra.mxu0 %v170
    %253 = vmatprep.subr.bf16.mxu0 %v175
    %254 = vmatpush1.bf16.msra.mxu0 %v174
    %255 = vmatprep.subr.bf16.mxu0 %v179
    %256 = vmatpush1.bf16.msra.mxu0 %v178
    %257 = vmatprep.subr.bf16.mxu0 %v183
    %258 = vmatpush1.bf16.msra.mxu0 %v182
    %259 = vmatprep.subr.bf16.mxu0 0
    %260 = vmatpush1.bf16.msra.mxu0 0
    %261 = vmatprep.subr.bf16.mxu0 0
    %262 = vmatpush1.bf16.msra.mxu0 0
    %263 = vmatprep.subr.bf16.mxu0 0
    %264 = vmatpush1.bf16.msra.mxu0 0
    %265 = vmatprep.subr.bf16.mxu0 0
    %266 = vmatpush1.bf16.msra.mxu0 0
    %267 = vmatprep.subr.bf16.mxu0 0
    %268 = vmatpush1.bf16.msra.mxu0 0
    %269 = vmatprep.subr.bf16.mxu0 0
    %270 = vmatpush1.bf16.msra.mxu0 0
    %271 = vmatprep.subr.bf16.mxu0 0
    %272 = vmatpush1.bf16.msra.mxu0 0
    %273 = vmatprep.subr.bf16.mxu0 0
    %274 = vmatpush1.bf16.msra.mxu0 0
    %275 = vmatprep.subr.bf16.mxu0 0
    %276 = vmatpush1.bf16.msra.mxu0 0
    %277 = vmatprep.subr.bf16.mxu0 0
    %278 = vmatpush1.bf16.msra.mxu0 0
    %279 = vmatprep.subr.bf16.mxu0 0
    %280 = vmatpush1.bf16.msra.mxu0 0
    %281 = vmatprep.subr.bf16.mxu0 0
    %282 = vmatpush1.bf16.msra.mxu0 0
    %283 = vmatprep.mubr.bf16.mxu0 0
    %284 = vmatmul.mubr.bf16.gmra.mrb[0].mxu0 %v204
    %v285 = vpop.f32.mrb[0].mxu0
    %v286 = vadd.f32 %v105, %v285
    %v287 = vpop.f32.mrb[0].mxu0
    %v288 = vadd.f32 %v109, %v287
    %v289 = vpop.f32.mrb[0].mxu0
    %v290 = vadd.f32 %v105, %v289
    %v291 = vpop.f32.mrb[0].mxu0
    %v292 = vadd.f32 %v109, %v291
    %293 = vmatprep.mubr.bf16.mxu0 0
    %294 = vmatmul.mubr.bf16.gmra.mrb[0].mxu0 %v207
    %v295 = vpop.f32.mrb[0].mxu0
    %v296 = vadd.f32 %v105, %v295
    %v297 = vpop.f32.mrb[0].mxu0
    %v298 = vadd.f32 %v109, %v297
    %v299 = vpop.f32.mrb[0].mxu0
    %v300 = vadd.f32 %v105, %v299
    %v301 = vpop.f32.mrb[0].mxu0
    %v302 = vadd.f32 %v109, %v301
    %303 = vmatprep.mubr.bf16.mxu0 0
    %304 = vmatmul.mubr.bf16.gmra.mrb[0].mxu0 %v210
    %v305 = vpop.f32.mrb[0].mxu0
    %v306 = vadd.f32 %v105, %v305
    %v307 = vpop.f32.mrb[0].mxu0
    %v308 = vadd.f32 %v109, %v307
    %v309 = vpop.f32.mrb[0].mxu0
    %v310 = vadd.f32 %v105, %v309
    %v311 = vpop.f32.mrb[0].mxu0
    %v312 = vadd.f32 %v109, %v311
    %313 = vmatprep.mubr.bf16.mxu0 0
    %314 = vmatmul.mubr.bf16.gmra.mrb[0].mxu0 %v213
    %v315 = vpop.f32.mrb[0].mxu0
    %v316 = vadd.f32 %v105, %v315
    %v317 = vpop.f32.mrb[0].mxu0
    %v318 = vadd.f32 %v109, %v317
    %v319 = vpop.f32.mrb[0].mxu0
    %v320 = vadd.f32 %v105, %v319
    %v321 = vpop.f32.mrb[0].mxu0
    %v322 = vadd.f32 %v109, %v321
    %323 = vmatprep.mubr.bf16.mxu0 0
    %324 = vmatmul.mubr.bf16.gmra.mrb[0].mxu0 %v216
    %v325 = vpop.f32.mrb[0].mxu0
    %v326 = vadd.f32 %v105, %v325
    %v327 = vpop.f32.mrb[0].mxu0
    %v328 = vadd.f32 %v109, %v327
    %v329 = vpop.f32.mrb[0].mxu0
    %v330 = vadd.f32 %v105, %v329
    %v331 = vpop.f32.mrb[0].mxu0
    %v332 = vadd.f32 %v109, %v331
    %333 = vmatprep.mubr.bf16.mxu0 0
    %334 = vmatmul.mubr.bf16.gmra.mrb[0].mxu0 %v219
    %v335 = vpop.f32.mrb[0].mxu0
    %v336 = vadd.f32 %v105, %v335
    %v337 = vpop.f32.mrb[0].mxu0
    %v338 = vadd.f32 %v109, %v337
    %v339 = vpop.f32.mrb[0].mxu0
    %v340 = vadd.f32 %v105, %v339
    %v341 = vpop.f32.mrb[0].mxu0
    %v342 = vadd.f32 %v109, %v341
    %343 = vmatprep.mubr.bf16.mxu0 0
    %344 = vmatmul.mubr.bf16.gmra.mrb[0].mxu0 %v222
    %v345 = vpop.f32.mrb[0].mxu0
    %v346 = vadd.f32 %v105, %v345
    %v347 = vpop.f32.mrb[0].mxu0
    %v348 = vadd.f32 %v109, %v347
    %v349 = vpop.f32.mrb[0].mxu0
    %v350 = vadd.f32 %v105, %v349
    %v351 = vpop.f32.mrb[0].mxu0
    %v352 = vadd.f32 %v109, %v351
    %353 = vmatprep.mubr.bf16.mxu0 0
    %354 = vmatmul.mubr.bf16.gmra.mrb[0].mxu0 %v225
    %v355 = vpop.f32.mrb[0].mxu0
    %v356 = vadd.f32 %v105, %v355
    %v357 = vpop.f32.mrb[0].mxu0
    %v358 = vadd.f32 %v109, %v357
    %v359 = vpop.f32.mrb[0].mxu0
    %v360 = vadd.f32 %v105, %v359
    %v361 = vpop.f32.mrb[0].mxu0
    %v362 = vadd.f32 %v109, %v361
    %363 = vmatprep.mubr.bf16.mxu0 0
    %364 = vmatmul.mubr.bf16.gmra.mrb[0].mxu0 %v228
    %v365 = vpop.f32.mrb[0].mxu0
    %v366 = vadd.f32 %v105, %v365
    %v367 = vpop.f32.mrb[0].mxu0
    %v368 = vadd.f32 %v109, %v367
    %v369 = vpop.f32.mrb[0].mxu0
    %v370 = vadd.f32 %v105, %v369
    %v371 = vpop.f32.mrb[0].mxu0
    %v372 = vadd.f32 %v109, %v371
    %373 = vmatprep.mubr.bf16.mxu0 0
    %374 = vmatmul.mubr.bf16.gmra.mrb[0].mxu0 %v231
    %v375 = vpop.f32.mrb[0].mxu0
    %v376 = vadd.f32 %v105, %v375
    %v377 = vpop.f32.mrb[0].mxu0
    %v378 = vadd.f32 %v109, %v377
    %v379 = vpop.f32.mrb[0].mxu0
    %v380 = vadd.f32 %v105, %v379
    %v381 = vpop.f32.mrb[0].mxu0
    %v382 = vadd.f32 %v109, %v381
    %383 = vmatprep.mubr.bf16.mxu0 0
    %384 = vmatmul.mubr.bf16.gmra.mrb[0].mxu0 %v234
    %v385 = vpop.f32.mrb[0].mxu0
    %v386 = vadd.f32 %v105, %v385
    %v387 = vpop.f32.mrb[0].mxu0
    %v388 = vadd.f32 %v109, %v387
    %v389 = vpop.f32.mrb[0].mxu0
    %v390 = vadd.f32 %v105, %v389
    %v391 = vpop.f32.mrb[0].mxu0
    %v392 = vadd.f32 %v109, %v391
    %393 = vmatprep.mubr.bf16.mxu0 0
    %394 = vmatmul.mubr.bf16.gmra.mrb[0].mxu0 %v237
    %v395 = vpop.f32.mrb[0].mxu0
    %v396 = vadd.f32 %v105, %v395
    %v397 = vpop.f32.mrb[0].mxu0
    %v398 = vadd.f32 %v109, %v397
    %v399 = vpop.f32.mrb[0].mxu0
    %v400 = vadd.f32 %v105, %v399
    %v401 = vpop.f32.mrb[0].mxu0
    %v402 = vadd.f32 %v109, %v401
    %403 = vmatprep.mubr.bf16.mxu0 0
    %404 = vmatmul.mubr.bf16.gmra.mrb[0].mxu0 %v240
    %v405 = vpop.f32.mrb[0].mxu0
    %v406 = vadd.f32 %v105, %v405
    %v407 = vpop.f32.mrb[0].mxu0
    %v408 = vadd.f32 %v109, %v407
    %v409 = vpop.f32.mrb[0].mxu0
    %v410 = vadd.f32 %v105, %v409
    %v411 = vpop.f32.mrb[0].mxu0
    %v412 = vadd.f32 %v109, %v411
    %413 = vmatprep.mubr.bf16.mxu0 0
    %414 = vmatmul.mubr.bf16.gmra.mrb[0].mxu0 %v243
    %v415 = vpop.f32.mrb[0].mxu0
    %v416 = vadd.f32 %v105, %v415
    %v417 = vpop.f32.mrb[0].mxu0
    %v418 = vadd.f32 %v109, %v417
    %v419 = vpop.f32.mrb[0].mxu0
    %v420 = vadd.f32 %v105, %v419
    %v421 = vpop.f32.mrb[0].mxu0
    %v422 = vadd.f32 %v109, %v421
    %423 = vmatprep.mubr.bf16.mxu0 0
    %424 = vmatmul.mubr.bf16.gmra.mrb[0].mxu0 %v246
    %v425 = vpop.f32.mrb[0].mxu0
    %v426 = vadd.f32 %v105, %v425
    %v427 = vpop.f32.mrb[0].mxu0
    %v428 = vadd.f32 %v109, %v427
    %v429 = vpop.f32.mrb[0].mxu0
    %v430 = vadd.f32 %v105, %v429
    %v431 = vpop.f32.mrb[0].mxu0
    %v432 = vadd.f32 %v109, %v431
    %433 = vmatprep.mubr.bf16.mxu0 0
    %434 = vmatmul.mubr.bf16.gmra.mrb[0].mxu0 %v249
    %v435 = vpop.f32.mrb[0].mxu0
    %v436 = vadd.f32 %v105, %v435
    %v437 = vpop.f32.mrb[0].mxu0
    %v438 = vadd.f32 %v109, %v437
    %v439 = vpop.f32.mrb[0].mxu0
    %v440 = vadd.f32 %v105, %v439
    %v441 = vpop.f32.mrb[0].mxu0
    %v442 = vadd.f32 %v109, %v441
    %443 = vdwg.mxu0
    %444 = vmatprep.subr.bf16.mxu0 %v173
    %445 = vmatpush1.bf16.msra.mxu0 %v172
    %446 = vmatprep.subr.bf16.mxu0 %v177
    %447 = vmatpush1.bf16.msra.mxu0 %v176
    %448 = vmatprep.subr.bf16.mxu0 %v181
    %449 = vmatpush1.bf16.msra.mxu0 %v180
    %450 = vmatprep.subr.bf16.mxu0 %v185
    %451 = vmatpush1.bf16.msra.mxu0 %v184
    %452 = vmatprep.subr.bf16.mxu0 0
    %453 = vmatpush1.bf16.msra.mxu0 0
    %454 = vmatprep.subr.bf16.mxu0 0
    %455 = vmatpush1.bf16.msra.mxu0 0
    %456 = vmatprep.subr.bf16.mxu0 0
    %457 = vmatpush1.bf16.msra.mxu0 0
    %458 = vmatprep.subr.bf16.mxu0 0
    %459 = vmatpush1.bf16.msra.mxu0 0
    %460 = vmatprep.subr.bf16.mxu0 0
    %461 = vmatpush1.bf16.msra.mxu0 0
    %462 = vmatprep.subr.bf16.mxu0 0
    %463 = vmatpush1.bf16.msra.mxu0 0
    %464 = vmatprep.subr.bf16.mxu0 0
    %465 = vmatpush1.bf16.msra.mxu0 0
    %466 = vmatprep.subr.bf16.mxu0 0
    %467 = vmatpush1.bf16.msra.mxu0 0
    %468 = vmatprep.subr.bf16.mxu0 0
    %469 = vmatpush1.bf16.msra.mxu0 0
    %470 = vmatprep.subr.bf16.mxu0 0
    %471 = vmatpush1.bf16.msra.mxu0 0
    %472 = vmatprep.subr.bf16.mxu0 0
    %473 = vmatpush1.bf16.msra.mxu0 0
    %474 = vmatprep.subr.bf16.mxu0 0
    %475 = vmatpush1.bf16.msra.mxu0 0
    %476 = vmatprep.mubr.bf16.mxu0 0
    %477 = vmatmul.mubr.bf16.gmra.mrb[0].mxu0 %v204
    %v478 = vpop.f32.mrb[0].mxu0
    %v479 = vadd.f32 %v113, %v478
    %v480 = vpop.f32.mrb[0].mxu0
    %v481 = vadd.f32 %v117, %v480
    %v482 = vpop.f32.mrb[0].mxu0
    %v483 = vadd.f32 %v113, %v482
    %v484 = vpop.f32.mrb[0].mxu0
    %v485 = vadd.f32 %v117, %v484
    %486 = vmatprep.mubr.bf16.mxu0 0
    %487 = vmatmul.mubr.bf16.gmra.mrb[0].mxu0 %v207
    %v488 = vpop.f32.mrb[0].mxu0
    %v489 = vadd.f32 %v113, %v488
    %v490 = vpop.f32.mrb[0].mxu0
    %v491 = vadd.f32 %v117, %v490
    %v492 = vpop.f32.mrb[0].mxu0
    %v493 = vadd.f32 %v113, %v492
    %v494 = vpop.f32.mrb[0].mxu0
    %v495 = vadd.f32 %v117, %v494
    %496 = vmatprep.mubr.bf16.mxu0 0
    %497 = vmatmul.mubr.bf16.gmra.mrb[0].mxu0 %v210
    %v498 = vpop.f32.mrb[0].mxu0
    %v499 = vadd.f32 %v113, %v498
    %v500 = vpop.f32.mrb[0].mxu0
    %v501 = vadd.f32 %v117, %v500
    %v502 = vpop.f32.mrb[0].mxu0
    %v503 = vadd.f32 %v113, %v502
    %v504 = vpop.f32.mrb[0].mxu0
    %v505 = vadd.f32 %v117, %v504
    %506 = vmatprep.mubr.bf16.mxu0 0
    %507 = vmatmul.mubr.bf16.gmra.mrb[0].mxu0 %v213
    %v508 = vpop.f32.mrb[0].mxu0
    %v509 = vadd.f32 %v113, %v508
    %v510 = vpop.f32.mrb[0].mxu0
    %v511 = vadd.f32 %v117, %v510
    %v512 = vpop.f32.mrb[0].mxu0
    %v513 = vadd.f32 %v113, %v512
    %v514 = vpop.f32.mrb[0].mxu0
    %v515 = vadd.f32 %v117, %v514
    %516 = vmatprep.mubr.bf16.mxu0 0
    %517 = vmatmul.mubr.bf16.gmra.mrb[0].mxu0 %v216
    %v518 = vpop.f32.mrb[0].mxu0
    %v519 = vadd.f32 %v113, %v518
    %v520 = vpop.f32.mrb[0].mxu0
    %v521 = vadd.f32 %v117, %v520
    %v522 = vpop.f32.mrb[0].mxu0
    %v523 = vadd.f32 %v113, %v522
    %v524 = vpop.f32.mrb[0].mxu0
    %v525 = vadd.f32 %v117, %v524
    %526 = vmatprep.mubr.bf16.mxu0 0
    %527 = vmatmul.mubr.bf16.gmra.mrb[0].mxu0 %v219
    %v528 = vpop.f32.mrb[0].mxu0
    %v529 = vadd.f32 %v113, %v528
    %v530 = vpop.f32.mrb[0].mxu0
    %v531 = vadd.f32 %v117, %v530
    %v532 = vpop.f32.mrb[0].mxu0
    %v533 = vadd.f32 %v113, %v532
    %v534 = vpop.f32.mrb[0].mxu0
    %v535 = vadd.f32 %v117, %v534
    %536 = vmatprep.mubr.bf16.mxu0 0
    %537 = vmatmul.mubr.bf16.gmra.mrb[0].mxu0 %v222
    %v538 = vpop.f32.mrb[0].mxu0
    %v539 = vadd.f32 %v113, %v538
    %v540 = vpop.f32.mrb[0].mxu0
    %v541 = vadd.f32 %v117, %v540
    %v542 = vpop.f32.mrb[0].mxu0
    %v543 = vadd.f32 %v113, %v542
    %v544 = vpop.f32.mrb[0].mxu0
    %v545 = vadd.f32 %v117, %v544
    %546 = vmatprep.mubr.bf16.mxu0 0
    %547 = vmatmul.mubr.bf16.gmra.mrb[0].mxu0 %v225
    %v548 = vpop.f32.mrb[0].mxu0
    %v549 = vadd.f32 %v113, %v548
    %v550 = vpop.f32.mrb[0].mxu0
    %v551 = vadd.f32 %v117, %v550
    %v552 = vpop.f32.mrb[0].mxu0
    %v553 = vadd.f32 %v113, %v552
    %v554 = vpop.f32.mrb[0].mxu0
    %v555 = vadd.f32 %v117, %v554
    %556 = vmatprep.mubr.bf16.mxu0 0
    %557 = vmatmul.mubr.bf16.gmra.mrb[0].mxu0 %v228
    %v558 = vpop.f32.mrb[0].mxu0
    %v559 = vadd.f32 %v113, %v558
    %v560 = vpop.f32.mrb[0].mxu0
    %v561 = vadd.f32 %v117, %v560
    %v562 = vpop.f32.mrb[0].mxu0
    %v563 = vadd.f32 %v113, %v562
    %v564 = vpop.f32.mrb[0].mxu0
    %v565 = vadd.f32 %v117, %v564
    %566 = vmatprep.mubr.bf16.mxu0 0
    %567 = vmatmul.mubr.bf16.gmra.mrb[0].mxu0 %v231
    %v568 = vpop.f32.mrb[0].mxu0
    %v569 = vadd.f32 %v113, %v568
    %v570 = vpop.f32.mrb[0].mxu0
    %v571 = vadd.f32 %v117, %v570
    %v572 = vpop.f32.mrb[0].mxu0
    %v573 = vadd.f32 %v113, %v572
    %v574 = vpop.f32.mrb[0].mxu0
    %v575 = vadd.f32 %v117, %v574
    %576 = vmatprep.mubr.bf16.mxu0 0
    %577 = vmatmul.mubr.bf16.gmra.mrb[0].mxu0 %v234
    %v578 = vpop.f32.mrb[0].mxu0
    %v579 = vadd.f32 %v113, %v578
    %v580 = vpop.f32.mrb[0].mxu0
    %v581 = vadd.f32 %v117, %v580
    %v582 = vpop.f32.mrb[0].mxu0
    %v583 = vadd.f32 %v113, %v582
    %v584 = vpop.f32.mrb[0].mxu0
    %v585 = vadd.f32 %v117, %v584
    %586 = vmatprep.mubr.bf16.mxu0 0
    %587 = vmatmul.mubr.bf16.gmra.mrb[0].mxu0 %v237
    %v588 = vpop.f32.mrb[0].mxu0
    %v589 = vadd.f32 %v113, %v588
    %v590 = vpop.f32.mrb[0].mxu0
    %v591 = vadd.f32 %v117, %v590
    %v592 = vpop.f32.mrb[0].mxu0
    %v593 = vadd.f32 %v113, %v592
    %v594 = vpop.f32.mrb[0].mxu0
    %v595 = vadd.f32 %v117, %v594
    %596 = vmatprep.mubr.bf16.mxu0 0
    %597 = vmatmul.mubr.bf16.gmra.mrb[0].mxu0 %v240
    %v598 = vpop.f32.mrb[0].mxu0
    %v599 = vadd.f32 %v113, %v598
    %v600 = vpop.f32.mrb[0].mxu0
    %v601 = vadd.f32 %v117, %v600
    %v602 = vpop.f32.mrb[0].mxu0
    %v603 = vadd.f32 %v113, %v602
    %v604 = vpop.f32.mrb[0].mxu0
    %v605 = vadd.f32 %v117, %v604
    %606 = vmatprep.mubr.bf16.mxu0 0
    %607 = vmatmul.mubr.bf16.gmra.mrb[0].mxu0 %v243
    %v608 = vpop.f32.mrb[0].mxu0
    %v609 = vadd.f32 %v113, %v608
    %v610 = vpop.f32.mrb[0].mxu0
    %v611 = vadd.f32 %v117, %v610
    %v612 = vpop.f32.mrb[0].mxu0
    %v613 = vadd.f32 %v113, %v612
    %v614 = vpop.f32.mrb[0].mxu0
    %v615 = vadd.f32 %v117, %v614
    %616 = vmatprep.mubr.bf16.mxu0 0
    %617 = vmatmul.mubr.bf16.gmra.mrb[0].mxu0 %v246
    %v618 = vpop.f32.mrb[0].mxu0
    %v619 = vadd.f32 %v113, %v618
    %v620 = vpop.f32.mrb[0].mxu0
    %v621 = vadd.f32 %v117, %v620
    %v622 = vpop.f32.mrb[0].mxu0
    %v623 = vadd.f32 %v113, %v622
    %v624 = vpop.f32.mrb[0].mxu0
    %v625 = vadd.f32 %v117, %v624
    %626 = vmatprep.mubr.bf16.mxu0 0
    %627 = vmatmul.mubr.bf16.gmra.mrb[0].mxu0 %v249
    %v628 = vpop.f32.mrb[0].mxu0
    %v629 = vadd.f32 %v113, %v628
    %v630 = vpop.f32.mrb[0].mxu0
    %v631 = vadd.f32 %v117, %v630
    %v632 = vpop.f32.mrb[0].mxu0
    %v633 = vadd.f32 %v113, %v632
    %v634 = vpop.f32.mrb[0].mxu0
    %v635 = vadd.f32 %v117, %v634
    %636 = vdwg.mxu0
    %v637 = vmax.f32 %v286, 0.0
    %v638 = vmax.f32 %v288, 0.0
    %v639 = vmax.f32 %v479, 0.0
    %v640 = vmax.f32 %v481, 0.0
    %v641 = vmax.f32 %v290, 0.0
    %v642 = vmax.f32 %v292, 0.0
    %v643 = vmax.f32 %v483, 0.0
    %v644 = vmax.f32 %v485, 0.0
    %v645 = vmax.f32 %v296, 0.0
    %v646 = vmax.f32 %v298, 0.0
    %v647 = vmax.f32 %v489, 0.0
    %v648 = vmax.f32 %v491, 0.0
    %v649 = vmax.f32 %v300, 0.0
    %v650 = vmax.f32 %v302, 0.0
    %v651 = vmax.f32 %v493, 0.0
    %v652 = vmax.f32 %v495, 0.0
    %v653 = vmax.f32 %v306, 0.0
    %v654 = vmax.f32 %v308, 0.0
    %v655 = vmax.f32 %v499, 0.0
    %v656 = vmax.f32 %v501, 0.0
    %v657 = vmax.f32 %v310, 0.0
    %v658 = vmax.f32 %v312, 0.0
    %v659 = vmax.f32 %v503, 0.0
    %v660 = vmax.f32 %v505, 0.0
    %v661 = vmax.f32 %v316, 0.0
    %v662 = vmax.f32 %v318, 0.0
    %v663 = vmax.f32 %v509, 0.0
    %v664 = vmax.f32 %v511, 0.0
    %v665 = vmax.f32 %v320, 0.0
    %v666 = vmax.f32 %v322, 0.0
    %v667 = vmax.f32 %v513, 0.0
    %v668 = vmax.f32 %v515, 0.0
    %v669 = vmax.f32 %v326, 0.0
    %v670 = vmax.f32 %v328, 0.0
    %v671 = vmax.f32 %v519, 0.0
    %v672 = vmax.f32 %v521, 0.0
    %v673 = vmax.f32 %v330, 0.0
    %v674 = vmax.f32 %v332, 0.0
    %v675 = vmax.f32 %v523, 0.0
    %v676 = vmax.f32 %v525, 0.0
    %v677 = vmax.f32 %v336, 0.0
    %v678 = vmax.f32 %v338, 0.0
    %v679 = vmax.f32 %v529, 0.0
    %v680 = vmax.f32 %v531, 0.0
    %v681 = vmax.f32 %v340, 0.0
    %v682 = vmax.f32 %v342, 0.0
    %v683 = vmax.f32 %v533, 0.0
    %v684 = vmax.f32 %v535, 0.0
    %v685 = vmax.f32 %v346, 0.0
    %v686 = vmax.f32 %v348, 0.0
    %v687 = vmax.f32 %v539, 0.0
    %v688 = vmax.f32 %v541, 0.0
    %v689 = vmax.f32 %v350, 0.0
    %v690 = vmax.f32 %v352, 0.0
    %v691 = vmax.f32 %v543, 0.0
    %v692 = vmax.f32 %v545, 0.0
    %v693 = vmax.f32 %v356, 0.0
    %v694 = vmax.f32 %v358, 0.0
    %v695 = vmax.f32 %v549, 0.0
    %v696 = vmax.f32 %v551, 0.0
    %v697 = vmax.f32 %v360, 0.0
    %v698 = vmax.f32 %v362, 0.0
    %v699 = vmax.f32 %v553, 0.0
    %v700 = vmax.f32 %v555, 0.0
    %v701 = vmax.f32 %v366, 0.0
    %v702 = vmax.f32 %v368, 0.0
    %v703 = vmax.f32 %v559, 0.0
    %v704 = vmax.f32 %v561, 0.0
    %v705 = vmax.f32 %v370, 0.0
    %v706 = vmax.f32 %v372, 0.0
    %v707 = vmax.f32 %v563, 0.0
    %v708 = vmax.f32 %v565, 0.0
    %v709 = vmax.f32 %v376, 0.0
    %v710 = vmax.f32 %v378, 0.0
    %v711 = vmax.f32 %v569, 0.0
    %v712 = vmax.f32 %v571, 0.0
    %v713 = vmax.f32 %v380, 0.0
    %v714 = vmax.f32 %v382, 0.0
    %v715 = vmax.f32 %v573, 0.0
    %v716 = vmax.f32 %v575, 0.0
    %v717 = vmax.f32 %v386, 0.0
    %v718 = vmax.f32 %v388, 0.0
    %v719 = vmax.f32 %v579, 0.0
    %v720 = vmax.f32 %v581, 0.0
    %v721 = vmax.f32 %v390, 0.0
    %v722 = vmax.f32 %v392, 0.0
    %v723 = vmax.f32 %v583, 0.0
    %v724 = vmax.f32 %v585, 0.0
    %v725 = vmax.f32 %v396, 0.0
    %v726 = vmax.f32 %v398, 0.0
    %v727 = vmax.f32 %v589, 0.0
    %v728 = vmax.f32 %v591, 0.0
    %v729 = vmax.f32 %v400, 0.0
    %v730 = vmax.f32 %v402, 0.0
    %v731 = vmax.f32 %v593, 0.0
    %v732 = vmax.f32 %v595, 0.0
    %v733 = vmax.f32 %v406, 0.0
    %v734 = vmax.f32 %v408, 0.0
    %v735 = vmax.f32 %v599, 0.0
    %v736 = vmax.f32 %v601, 0.0
    %v737 = vmax.f32 %v410, 0.0
    %v738 = vmax.f32 %v412, 0.0
    %v739 = vmax.f32 %v603, 0.0
    %v740 = vmax.f32 %v605, 0.0
    %v741 = vmax.f32 %v416, 0.0
    %v742 = vmax.f32 %v418, 0.0
    %v743 = vmax.f32 %v609, 0.0
    %v744 = vmax.f32 %v611, 0.0
    %v745 = vmax.f32 %v420, 0.0
    %v746 = vmax.f32 %v422, 0.0
    %v747 = vmax.f32 %v613, 0.0
    %v748 = vmax.f32 %v615, 0.0
    %v749 = vmax.f32 %v426, 0.0
    %v750 = vmax.f32 %v428, 0.0
    %v751 = vmax.f32 %v619, 0.0
    %v752 = vmax.f32 %v621, 0.0
    %v753 = vmax.f32 %v430, 0.0
    %v754 = vmax.f32 %v432, 0.0
    %v755 = vmax.f32 %v623, 0.0
    %v756 = vmax.f32 %v625, 0.0
    %v757 = vmax.f32 %v436, 0.0
    %v758 = vmax.f32 %v438, 0.0
    %v759 = vmax.f32 %v629, 0.0
    %v760 = vmax.f32 %v631, 0.0
    %v761 = vmax.f32 %v440, 0.0
    %v762 = vmax.f32 %v442, 0.0
    %v763 = vmax.f32 %v633, 0.0
    %v764 = vmax.f32 %v635, 0.0
    %v765 = vpack.c.bf16 %v641, %v637
    %v766 = vpack.c.bf16 %v642, %v638
    %v767 = vpack.c.bf16 %v643, %v639
    %v768 = vpack.c.bf16 %v644, %v640
    %v769 = vpack.c.bf16 %v649, %v645
    %v770 = vpack.c.bf16 %v650, %v646
    %v771 = vpack.c.bf16 %v651, %v647
    %v772 = vpack.c.bf16 %v652, %v648
    %v773 = vpack.c.bf16 %v657, %v653
    %v774 = vpack.c.bf16 %v658, %v654
    %v775 = vpack.c.bf16 %v659, %v655
    %v776 = vpack.c.bf16 %v660, %v656
    %v777 = vpack.c.bf16 %v665, %v661
    %v778 = vpack.c.bf16 %v666, %v662
    %v779 = vpack.c.bf16 %v667, %v663
    %v780 = vpack.c.bf16 %v668, %v664
    %v781 = vpack.c.bf16 %v673, %v669
    %v782 = vpack.c.bf16 %v674, %v670
    %v783 = vpack.c.bf16 %v675, %v671
    %v784 = vpack.c.bf16 %v676, %v672
    %v785 = vpack.c.bf16 %v681, %v677
    %v786 = vpack.c.bf16 %v682, %v678
    %v787 = vpack.c.bf16 %v683, %v679
    %v788 = vpack.c.bf16 %v684, %v680
    %v789 = vpack.c.bf16 %v689, %v685
    %v790 = vpack.c.bf16 %v690, %v686
    %v791 = vpack.c.bf16 %v691, %v687
    %v792 = vpack.c.bf16 %v692, %v688
    %v793 = vpack.c.bf16 %v697, %v693
    %v794 = vpack.c.bf16 %v698, %v694
    %v795 = vpack.c.bf16 %v699, %v695
    %v796 = vpack.c.bf16 %v700, %v696
    %v797 = vpack.c.bf16 %v705, %v701
    %v798 = vpack.c.bf16 %v706, %v702
    %v799 = vpack.c.bf16 %v707, %v703
    %v800 = vpack.c.bf16 %v708, %v704
    %v801 = vpack.c.bf16 %v713, %v709
    %v802 = vpack.c.bf16 %v714, %v710
    %v803 = vpack.c.bf16 %v715, %v711
    %v804 = vpack.c.bf16 %v716, %v712
    %v805 = vpack.c.bf16 %v721, %v717
    %v806 = vpack.c.bf16 %v722, %v718
    %v807 = vpack.c.bf16 %v723, %v719
    %v808 = vpack.c.bf16 %v724, %v720
    %v809 = vpack.c.bf16 %v729, %v725
    %v810 = vpack.c.bf16 %v730, %v726
    %v811 = vpack.c.bf16 %v731, %v727
    %v812 = vpack.c.bf16 %v732, %v728
    %v813 = vpack.c.bf16 %v737, %v733
    %v814 = vpack.c.bf16 %v738, %v734
    %v815 = vpack.c.bf16 %v739, %v735
    %v816 = vpack.c.bf16 %v740, %v736
    %v817 = vpack.c.bf16 %v745, %v741
    %v818 = vpack.c.bf16 %v746, %v742
    %v819 = vpack.c.bf16 %v747, %v743
    %v820 = vpack.c.bf16 %v748, %v744
    %v821 = vpack.c.bf16 %v753, %v749
    %v822 = vpack.c.bf16 %v754, %v750
    %v823 = vpack.c.bf16 %v755, %v751
    %v824 = vpack.c.bf16 %v756, %v752
    %v825 = vpack.c.bf16 %v761, %v757
    %v826 = vpack.c.bf16 %v762, %v758
    %v827 = vpack.c.bf16 %v763, %v759
    %v828 = vpack.c.bf16 %v764, %v760
    %v829 = vld [vmem:[%s3] sm:$0xf]
    %v830 = vld [vmem:[%s3 + $0x4] sm:$0xf]
    %v831 = vld [vmem:[%s3 + $0x8] sm:$0xf]
    %v832 = vld [vmem:[%s3 + $0xc] sm:$0xf]
    %v833 = vld [vmem:[%s3 + $0x10] sm:$0xf]
    %v834 = vld [vmem:[%s3 + $0x14] sm:$0xf]
    %v835 = vld [vmem:[%s3 + $0x18] sm:$0xf]
    %v836 = vld [vmem:[%s3 + $0x1c] sm:$0xf]
    %v837 = vld [vmem:[%s3 + $0x20] sm:$0xf]
    %v838 = vld [vmem:[%s3 + $0x24] sm:$0xf]
    %v839 = vld [vmem:[%s3 + $0x28] sm:$0xf]
    %v840 = vld [vmem:[%s3 + $0x2c] sm:$0xf]
    %v841 = vld [vmem:[%s3 + $0x30] sm:$0xf]
    %v842 = vld [vmem:[%s3 + $0x34] sm:$0xf]
    %v843 = vld [vmem:[%s3 + $0x38] sm:$0xf]
    %v844 = vld [vmem:[%s3 + $0x3c] sm:$0xf]
    %v845 = vld [vmem:[%s3 + $0x40] sm:$0xf]
    %v846 = vld [vmem:[%s3 + $0x44] sm:$0xf]
    %v847 = vld [vmem:[%s3 + $0x48] sm:$0xf]
    %v848 = vld [vmem:[%s3 + $0x4c] sm:$0xf]
    %v849 = vld [vmem:[%s3 + $0x50] sm:$0xf]
    %v850 = vld [vmem:[%s3 + $0x54] sm:$0xf]
    %v851 = vld [vmem:[%s3 + $0x58] sm:$0xf]
    %v852 = vld [vmem:[%s3 + $0x5c] sm:$0xf]
    %v853 = vld [vmem:[%s3 + $0x60] sm:$0xf]
    %v854 = vld [vmem:[%s3 + $0x64] sm:$0xf]
    %v855 = vld [vmem:[%s3 + $0x68] sm:$0xf]
    %v856 = vld [vmem:[%s3 + $0x6c] sm:$0xf]
    %v857 = vld [vmem:[%s3 + $0x70] sm:$0xf]
    %v858 = vld [vmem:[%s3 + $0x74] sm:$0xf]
    %v859 = vld [vmem:[%s3 + $0x78] sm:$0xf]
    %v860 = vld [vmem:[%s3 + $0x7c] sm:$0xf]
    %v861 = vld [vmem:[%s3 + $0x80] sm:$0xf]
    %v862 = vld [vmem:[%s3 + $0x84] sm:$0xf]
    %v863 = vld [vmem:[%s3 + $0x88] sm:$0xf]
    %v864 = vld [vmem:[%s3 + $0x8c] sm:$0xf]
    %v865 = vld [vmem:[%s3 + $0x90] sm:$0xf]
    %v866 = vld [vmem:[%s3 + $0x94] sm:$0xf]
    %v867 = vld [vmem:[%s3 + $0x98] sm:$0xf]
    %v868 = vld [vmem:[%s3 + $0x9c] sm:$0xf]
    %v869 = vld [vmem:[%s3 + $0xa0] sm:$0xf]
    %v870 = vld [vmem:[%s3 + $0xa4] sm:$0xf]
    %v871 = vld [vmem:[%s3 + $0xa8] sm:$0xf]
    %v872 = vld [vmem:[%s3 + $0xac] sm:$0xf]
    %v873 = vld [vmem:[%s3 + $0xb0] sm:$0xf]
    %v874 = vld [vmem:[%s3 + $0xb4] sm:$0xf]
    %v875 = vld [vmem:[%s3 + $0xb8] sm:$0xf]
    %v876 = vld [vmem:[%s3 + $0xbc] sm:$0xf]
    %v877 = vld [vmem:[%s3 + $0xc0] sm:$0xf]
    %v878 = vld [vmem:[%s3 + $0xc4] sm:$0xf]
    %v879 = vld [vmem:[%s3 + $0xc8] sm:$0xf]
    %v880 = vld [vmem:[%s3 + $0xcc] sm:$0xf]
    %v881 = vld [vmem:[%s3 + $0xd0] sm:$0xf]
    %v882 = vld [vmem:[%s3 + $0xd4] sm:$0xf]
    %v883 = vld [vmem:[%s3 + $0xd8] sm:$0xf]
    %v884 = vld [vmem:[%s3 + $0xdc] sm:$0xf]
    %v885 = vld [vmem:[%s3 + $0xe0] sm:$0xf]
    %v886 = vld [vmem:[%s3 + $0xe4] sm:$0xf]
    %v887 = vld [vmem:[%s3 + $0xe8] sm:$0xf]
    %v888 = vld [vmem:[%s3 + $0xec] sm:$0xf]
    %v889 = vld [vmem:[%s3 + $0xf0] sm:$0xf]
    %v890 = vld [vmem:[%s3 + $0xf4] sm:$0xf]
    %v891 = vld [vmem:[%s3 + $0xf8] sm:$0xf]
    %v892 = vld [vmem:[%s3 + $0xfc] sm:$0xf]
    %v893 = vld [vmem:[%s4] sm:$0x1]
    %v895 = vlaneseq
    %v896 = vshrl.u32 %v895, 7
    %v897 = vsub.s32 0, %v896
    %v898 = vrot.slane %v893, %v897
    %v964 = vunpack.c.l.b16 %v829
    %v965 = vunpack.c.l.b16 %v830
    %v966 = vunpack.c.l.b16 %v831
    %v967 = vunpack.c.l.b16 %v832
    %v968 = vunpack.c.l.b16 %v833
    %v969 = vunpack.c.l.b16 %v834
    %v970 = vunpack.c.l.b16 %v835
    %v971 = vunpack.c.l.b16 %v836
    %v972 = vunpack.c.l.b16 %v837
    %v973 = vunpack.c.l.b16 %v838
    %v974 = vunpack.c.l.b16 %v839
    %v975 = vunpack.c.l.b16 %v840
    %v976 = vunpack.c.l.b16 %v841
    %v977 = vunpack.c.l.b16 %v842
    %v978 = vunpack.c.l.b16 %v843
    %v979 = vunpack.c.l.b16 %v844
    %v980 = vunpack.c.l.b16 %v845
    %v981 = vunpack.c.l.b16 %v846
    %v982 = vunpack.c.l.b16 %v847
    %v983 = vunpack.c.l.b16 %v848
    %v984 = vunpack.c.l.b16 %v849
    %v985 = vunpack.c.l.b16 %v850
    %v986 = vunpack.c.l.b16 %v851
    %v987 = vunpack.c.l.b16 %v852
    %v988 = vunpack.c.l.b16 %v853
    %v989 = vunpack.c.l.b16 %v854
    %v990 = vunpack.c.l.b16 %v855
    %v991 = vunpack.c.l.b16 %v856
    %v992 = vunpack.c.l.b16 %v857
    %v993 = vunpack.c.l.b16 %v858
    %v994 = vunpack.c.l.b16 %v859
    %v995 = vunpack.c.l.b16 %v860
    %v996 = vunpack.c.l.b16 %v861
    %v997 = vunpack.c.l.b16 %v862
    %v998 = vunpack.c.l.b16 %v863
    %v999 = vunpack.c.l.b16 %v864
    %v1000 = vunpack.c.l.b16 %v865
    %v1001 = vunpack.c.l.b16 %v866
    %v1002 = vunpack.c.l.b16 %v867
    %v1003 = vunpack.c.l.b16 %v868
    %v1004 = vunpack.c.l.b16 %v869
    %v1005 = vunpack.c.l.b16 %v870
    %v1006 = vunpack.c.l.b16 %v871
    %v1007 = vunpack.c.l.b16 %v872
    %v1008 = vunpack.c.l.b16 %v873
    %v1009 = vunpack.c.l.b16 %v874
    %v1010 = vunpack.c.l.b16 %v875
    %v1011 = vunpack.c.l.b16 %v876
    %v1012 = vunpack.c.l.b16 %v877
    %v1013 = vunpack.c.l.b16 %v878
    %v1014 = vunpack.c.l.b16 %v879
    %v1015 = vunpack.c.l.b16 %v880
    %v1016 = vunpack.c.l.b16 %v881
    %v1017 = vunpack.c.l.b16 %v882
    %v1018 = vunpack.c.l.b16 %v883
    %v1019 = vunpack.c.l.b16 %v884
    %v1020 = vunpack.c.l.b16 %v885
    %v1021 = vunpack.c.l.b16 %v886
    %v1022 = vunpack.c.l.b16 %v887
    %v1023 = vunpack.c.l.b16 %v888
    %v1024 = vunpack.c.l.b16 %v889
    %v1025 = vunpack.c.l.b16 %v890
    %v1026 = vunpack.c.l.b16 %v891
    %v1027 = vunpack.c.l.b16 %v892
    %v1028 = vpack.c.b16 %v965, %v964
    %v1029 = vpack.c.b16 %v967, %v966
    %v1030 = vpack.c.b16 %v969, %v968
    %v1031 = vpack.c.b16 %v971, %v970
    %v1032 = vpack.c.b16 %v973, %v972
    %v1033 = vpack.c.b16 %v975, %v974
    %v1034 = vpack.c.b16 %v977, %v976
    %v1035 = vpack.c.b16 %v979, %v978
    %v1036 = vpack.c.b16 %v981, %v980
    %v1037 = vpack.c.b16 %v983, %v982
    %v1038 = vpack.c.b16 %v985, %v984
    %v1039 = vpack.c.b16 %v987, %v986
    %v1040 = vpack.c.b16 %v989, %v988
    %v1041 = vpack.c.b16 %v991, %v990
    %v1042 = vpack.c.b16 %v993, %v992
    %v1043 = vpack.c.b16 %v995, %v994
    %v1044 = vpack.c.b16 %v997, %v996
    %v1045 = vpack.c.b16 %v999, %v998
    %v1046 = vpack.c.b16 %v1001, %v1000
    %v1047 = vpack.c.b16 %v1003, %v1002
    %v1048 = vpack.c.b16 %v1005, %v1004
    %v1049 = vpack.c.b16 %v1007, %v1006
    %v1050 = vpack.c.b16 %v1009, %v1008
    %v1051 = vpack.c.b16 %v1011, %v1010
    %v1052 = vpack.c.b16 %v1013, %v1012
    %v1053 = vpack.c.b16 %v1015, %v1014
    %v1054 = vpack.c.b16 %v1017, %v1016
    %v1055 = vpack.c.b16 %v1019, %v1018
    %v1056 = vpack.c.b16 %v1021, %v1020
    %v1057 = vpack.c.b16 %v1023, %v1022
    %v1058 = vpack.c.b16 %v1025, %v1024
    %v1059 = vpack.c.b16 %v1027, %v1026
    %1092 = vmatprep.subr.bf16.mxu0 0
    %1093 = vmatpush1.bf16.msra.mxu0 %v1028
    %1094 = vmatprep.subr.bf16.mxu0 0
    %1095 = vmatpush1.bf16.msra.mxu0 %v1029
    %1096 = vmatprep.subr.bf16.mxu0 0
    %1097 = vmatpush1.bf16.msra.mxu0 %v1030
    %1098 = vmatprep.subr.bf16.mxu0 0
    %1099 = vmatpush1.bf16.msra.mxu0 %v1031
    %1100 = vmatprep.subr.bf16.mxu0 0
    %1101 = vmatpush1.bf16.msra.mxu0 %v1032
    %1102 = vmatprep.subr.bf16.mxu0 0
    %1103 = vmatpush1.bf16.msra.mxu0 %v1033
    %1104 = vmatprep.subr.bf16.mxu0 0
    %1105 = vmatpush1.bf16.msra.mxu0 %v1034
    %1106 = vmatprep.subr.bf16.mxu0 0
    %1107 = vmatpush1.bf16.msra.mxu0 %v1035
    %1108 = vmatprep.subr.bf16.mxu0 0
    %1109 = vmatpush1.bf16.msra.mxu0 %v1036
    %1110 = vmatprep.subr.bf16.mxu0 0
    %1111 = vmatpush1.bf16.msra.mxu0 %v1037
    %1112 = vmatprep.subr.bf16.mxu0 0
    %1113 = vmatpush1.bf16.msra.mxu0 %v1038
    %1114 = vmatprep.subr.bf16.mxu0 0
    %1115 = vmatpush1.bf16.msra.mxu0 %v1039
    %1116 = vmatprep.subr.bf16.mxu0 0
    %1117 = vmatpush1.bf16.msra.mxu0 %v1040
    %1118 = vmatprep.subr.bf16.mxu0 0
    %1119 = vmatpush1.bf16.msra.mxu0 %v1041
    %1120 = vmatprep.subr.bf16.mxu0 0
    %1121 = vmatpush1.bf16.msra.mxu0 %v1042
    %1122 = vmatprep.subr.bf16.mxu0 0
    %1123 = vmatpush1.bf16.msra.mxu0 %v1043
    %1124 = vmatprep.mubr.bf16.mxu0 %v766
    %1125 = vmatmul.mubr.bf16.gmra.mrb[0].mxu0 %v765
    %v1126 = vpop.f32.mrb[0].mxu0
    %v1127 = vadd.f32 %v898, %v1126
    %v1128 = vpop.f32.mrb[0].mxu0
    %v1129 = vpop.f32.mrb[0].mxu0
    %v1130 = vadd.f32 %v898, %v1129
    %v1131 = vpop.f32.mrb[0].mxu0
    %1132 = vmatprep.mubr.bf16.mxu0 %v770
    %1133 = vmatmul.mubr.bf16.gmra.mrb[0].mxu0 %v769
    %v1134 = vpop.f32.mrb[0].mxu0
    %v1135 = vadd.f32 %v898, %v1134
    %v1136 = vpop.f32.mrb[0].mxu0
    %v1137 = vpop.f32.mrb[0].mxu0
    %v1138 = vadd.f32 %v898, %v1137
    %v1139 = vpop.f32.mrb[0].mxu0
    %1140 = vmatprep.mubr.bf16.mxu0 %v774
    %1141 = vmatmul.mubr.bf16.gmra.mrb[0].mxu0 %v773
    %v1142 = vpop.f32.mrb[0].mxu0
    %v1143 = vadd.f32 %v898, %v1142
    %v1144 = vpop.f32.mrb[0].mxu0
    %v1145 = vpop.f32.mrb[0].mxu0
    %v1146 = vadd.f32 %v898, %v1145
    %v1147 = vpop.f32.mrb[0].mxu0
    %1148 = vmatprep.mubr.bf16.mxu0 %v778
    %1149 = vmatmul.mubr.bf16.gmra.mrb[0].mxu0 %v777
    %v1150 = vpop.f32.mrb[0].mxu0
    %v1151 = vadd.f32 %v898, %v1150
    %v1152 = vpop.f32.mrb[0].mxu0
    %v1153 = vpop.f32.mrb[0].mxu0
    %v1154 = vadd.f32 %v898, %v1153
    %v1155 = vpop.f32.mrb[0].mxu0
    %1156 = vmatprep.mubr.bf16.mxu0 %v782
    %1157 = vmatmul.mubr.bf16.gmra.mrb[0].mxu0 %v781
    %v1158 = vpop.f32.mrb[0].mxu0
    %v1159 = vadd.f32 %v898, %v1158
    %v1160 = vpop.f32.mrb[0].mxu0
    %v1161 = vpop.f32.mrb[0].mxu0
    %v1162 = vadd.f32 %v898, %v1161
    %v1163 = vpop.f32.mrb[0].mxu0
    %1164 = vmatprep.mubr.bf16.mxu0 %v786
    %1165 = vmatmul.mubr.bf16.gmra.mrb[0].mxu0 %v785
    %v1166 = vpop.f32.mrb[0].mxu0
    %v1167 = vadd.f32 %v898, %v1166
    %v1168 = vpop.f32.mrb[0].mxu0
    %v1169 = vpop.f32.mrb[0].mxu0
    %v1170 = vadd.f32 %v898, %v1169
    %v1171 = vpop.f32.mrb[0].mxu0
    %1172 = vmatprep.mubr.bf16.mxu0 %v790
    %1173 = vmatmul.mubr.bf16.gmra.mrb[0].mxu0 %v789
    %v1174 = vpop.f32.mrb[0].mxu0
    %v1175 = vadd.f32 %v898, %v1174
    %v1176 = vpop.f32.mrb[0].mxu0
    %v1177 = vpop.f32.mrb[0].mxu0
    %v1178 = vadd.f32 %v898, %v1177
    %v1179 = vpop.f32.mrb[0].mxu0
    %1180 = vmatprep.mubr.bf16.mxu0 %v794
    %1181 = vmatmul.mubr.bf16.gmra.mrb[0].mxu0 %v793
    %v1182 = vpop.f32.mrb[0].mxu0
    %v1183 = vadd.f32 %v898, %v1182
    %v1184 = vpop.f32.mrb[0].mxu0
    %v1185 = vpop.f32.mrb[0].mxu0
    %v1186 = vadd.f32 %v898, %v1185
    %v1187 = vpop.f32.mrb[0].mxu0
    %1188 = vmatprep.mubr.bf16.mxu0 %v798
    %1189 = vmatmul.mubr.bf16.gmra.mrb[0].mxu0 %v797
    %v1190 = vpop.f32.mrb[0].mxu0
    %v1191 = vadd.f32 %v898, %v1190
    %v1192 = vpop.f32.mrb[0].mxu0
    %v1193 = vpop.f32.mrb[0].mxu0
    %v1194 = vadd.f32 %v898, %v1193
    %v1195 = vpop.f32.mrb[0].mxu0
    %1196 = vmatprep.mubr.bf16.mxu0 %v802
    %1197 = vmatmul.mubr.bf16.gmra.mrb[0].mxu0 %v801
    %v1198 = vpop.f32.mrb[0].mxu0
    %v1199 = vadd.f32 %v898, %v1198
    %v1200 = vpop.f32.mrb[0].mxu0
    %v1201 = vpop.f32.mrb[0].mxu0
    %v1202 = vadd.f32 %v898, %v1201
    %v1203 = vpop.f32.mrb[0].mxu0
    %1204 = vmatprep.mubr.bf16.mxu0 %v806
    %1205 = vmatmul.mubr.bf16.gmra.mrb[0].mxu0 %v805
    %v1206 = vpop.f32.mrb[0].mxu0
    %v1207 = vadd.f32 %v898, %v1206
    %v1208 = vpop.f32.mrb[0].mxu0
    %v1209 = vpop.f32.mrb[0].mxu0
    %v1210 = vadd.f32 %v898, %v1209
    %v1211 = vpop.f32.mrb[0].mxu0
    %1212 = vmatprep.mubr.bf16.mxu0 %v810
    %1213 = vmatmul.mubr.bf16.gmra.mrb[0].mxu0 %v809
    %v1214 = vpop.f32.mrb[0].mxu0
    %v1215 = vadd.f32 %v898, %v1214
    %v1216 = vpop.f32.mrb[0].mxu0
    %v1217 = vpop.f32.mrb[0].mxu0
    %v1218 = vadd.f32 %v898, %v1217
    %v1219 = vpop.f32.mrb[0].mxu0
    %1220 = vmatprep.mubr.bf16.mxu0 %v814
    %1221 = vmatmul.mubr.bf16.gmra.mrb[0].mxu0 %v813
    %v1222 = vpop.f32.mrb[0].mxu0
    %v1223 = vadd.f32 %v898, %v1222
    %v1224 = vpop.f32.mrb[0].mxu0
    %v1225 = vpop.f32.mrb[0].mxu0
    %v1226 = vadd.f32 %v898, %v1225
    %v1227 = vpop.f32.mrb[0].mxu0
    %1228 = vmatprep.mubr.bf16.mxu0 %v818
    %1229 = vmatmul.mubr.bf16.gmra.mrb[0].mxu0 %v817
    %v1230 = vpop.f32.mrb[0].mxu0
    %v1231 = vadd.f32 %v898, %v1230
    %v1232 = vpop.f32.mrb[0].mxu0
    %v1233 = vpop.f32.mrb[0].mxu0
    %v1234 = vadd.f32 %v898, %v1233
    %v1235 = vpop.f32.mrb[0].mxu0
    %1236 = vmatprep.mubr.bf16.mxu0 %v822
    %1237 = vmatmul.mubr.bf16.gmra.mrb[0].mxu0 %v821
    %v1238 = vpop.f32.mrb[0].mxu0
    %v1239 = vadd.f32 %v898, %v1238
    %v1240 = vpop.f32.mrb[0].mxu0
    %v1241 = vpop.f32.mrb[0].mxu0
    %v1242 = vadd.f32 %v898, %v1241
    %v1243 = vpop.f32.mrb[0].mxu0
    %1244 = vmatprep.mubr.bf16.mxu0 %v826
    %1245 = vmatmul.mubr.bf16.gmra.mrb[0].mxu0 %v825
    %v1246 = vpop.f32.mrb[0].mxu0
    %v1247 = vadd.f32 %v898, %v1246
    %v1248 = vpop.f32.mrb[0].mxu0
    %v1249 = vpop.f32.mrb[0].mxu0
    %v1250 = vadd.f32 %v898, %v1249
    %v1251 = vpop.f32.mrb[0].mxu0
    %1252 = vdwg.mxu0
    %1253 = vmatprep.subr.bf16.mxu0 0
    %1254 = vmatpush1.bf16.msra.mxu0 %v1044
    %1255 = vmatprep.subr.bf16.mxu0 0
    %1256 = vmatpush1.bf16.msra.mxu0 %v1045
    %1257 = vmatprep.subr.bf16.mxu0 0
    %1258 = vmatpush1.bf16.msra.mxu0 %v1046
    %1259 = vmatprep.subr.bf16.mxu0 0
    %1260 = vmatpush1.bf16.msra.mxu0 %v1047
    %1261 = vmatprep.subr.bf16.mxu0 0
    %1262 = vmatpush1.bf16.msra.mxu0 %v1048
    %1263 = vmatprep.subr.bf16.mxu0 0
    %1264 = vmatpush1.bf16.msra.mxu0 %v1049
    %1265 = vmatprep.subr.bf16.mxu0 0
    %1266 = vmatpush1.bf16.msra.mxu0 %v1050
    %1267 = vmatprep.subr.bf16.mxu0 0
    %1268 = vmatpush1.bf16.msra.mxu0 %v1051
    %1269 = vmatprep.subr.bf16.mxu0 0
    %1270 = vmatpush1.bf16.msra.mxu0 %v1052
    %1271 = vmatprep.subr.bf16.mxu0 0
    %1272 = vmatpush1.bf16.msra.mxu0 %v1053
    %1273 = vmatprep.subr.bf16.mxu0 0
    %1274 = vmatpush1.bf16.msra.mxu0 %v1054
    %1275 = vmatprep.subr.bf16.mxu0 0
    %1276 = vmatpush1.bf16.msra.mxu0 %v1055
    %1277 = vmatprep.subr.bf16.mxu0 0
    %1278 = vmatpush1.bf16.msra.mxu0 %v1056
    %1279 = vmatprep.subr.bf16.mxu0 0
    %1280 = vmatpush1.bf16.msra.mxu0 %v1057
    %1281 = vmatprep.subr.bf16.mxu0 0
    %1282 = vmatpush1.bf16.msra.mxu0 %v1058
    %1283 = vmatprep.subr.bf16.mxu0 0
    %1284 = vmatpush1.bf16.msra.mxu0 %v1059
    %1285 = vmatprep.mubr.bf16.mxu0 %v768
    %1286 = vmatmul.mubr.bf16.gmra.mrb[0].mxu0 %v767
    %v1287 = vpop.f32.mrb[0].mxu0
    %v1288 = vadd.f32 %v1127, %v1287
    %v1289 = vpop.f32.mrb[0].mxu0
    %v1290 = vpop.f32.mrb[0].mxu0
    %v1291 = vadd.f32 %v1130, %v1290
    %v1292 = vpop.f32.mrb[0].mxu0
    %1293 = vmatprep.mubr.bf16.mxu0 %v772
    %1294 = vmatmul.mubr.bf16.gmra.mrb[0].mxu0 %v771
    %v1295 = vpop.f32.mrb[0].mxu0
    %v1296 = vadd.f32 %v1135, %v1295
    %v1297 = vpop.f32.mrb[0].mxu0
    %v1298 = vpop.f32.mrb[0].mxu0
    %v1299 = vadd.f32 %v1138, %v1298
    %v1300 = vpop.f32.mrb[0].mxu0
    %1301 = vmatprep.mubr.bf16.mxu0 %v776
    %1302 = vmatmul.mubr.bf16.gmra.mrb[0].mxu0 %v775
    %v1303 = vpop.f32.mrb[0].mxu0
    %v1304 = vadd.f32 %v1143, %v1303
    %v1305 = vpop.f32.mrb[0].mxu0
    %v1306 = vpop.f32.mrb[0].mxu0
    %v1307 = vadd.f32 %v1146, %v1306
    %v1308 = vpop.f32.mrb[0].mxu0
    %1309 = vmatprep.mubr.bf16.mxu0 %v780
    %1310 = vmatmul.mubr.bf16.gmra.mrb[0].mxu0 %v779
    %v1311 = vpop.f32.mrb[0].mxu0
    %v1312 = vadd.f32 %v1151, %v1311
    %v1313 = vpop.f32.mrb[0].mxu0
    %v1314 = vpop.f32.mrb[0].mxu0
    %v1315 = vadd.f32 %v1154, %v1314
    %v1316 = vpop.f32.mrb[0].mxu0
    %1317 = vmatprep.mubr.bf16.mxu0 %v784
    %1318 = vmatmul.mubr.bf16.gmra.mrb[0].mxu0 %v783
    %v1319 = vpop.f32.mrb[0].mxu0
    %v1320 = vadd.f32 %v1159, %v1319
    %v1321 = vpop.f32.mrb[0].mxu0
    %v1322 = vpop.f32.mrb[0].mxu0
    %v1323 = vadd.f32 %v1162, %v1322
    %v1324 = vpop.f32.mrb[0].mxu0
    %1325 = vmatprep.mubr.bf16.mxu0 %v788
    %1326 = vmatmul.mubr.bf16.gmra.mrb[0].mxu0 %v787
    %v1327 = vpop.f32.mrb[0].mxu0
    %v1328 = vadd.f32 %v1167, %v1327
    %v1329 = vpop.f32.mrb[0].mxu0
    %v1330 = vpop.f32.mrb[0].mxu0
    %v1331 = vadd.f32 %v1170, %v1330
    %v1332 = vpop.f32.mrb[0].mxu0
    %1333 = vmatprep.mubr.bf16.mxu0 %v792
    %1334 = vmatmul.mubr.bf16.gmra.mrb[0].mxu0 %v791
    %v1335 = vpop.f32.mrb[0].mxu0
    %v1336 = vadd.f32 %v1175, %v1335
    %v1337 = vpop.f32.mrb[0].mxu0
    %v1338 = vpop.f32.mrb[0].mxu0
    %v1339 = vadd.f32 %v1178, %v1338
    %v1340 = vpop.f32.mrb[0].mxu0
    %1341 = vmatprep.mubr.bf16.mxu0 %v796
    %1342 = vmatmul.mubr.bf16.gmra.mrb[0].mxu0 %v795
    %v1343 = vpop.f32.mrb[0].mxu0
    %v1344 = vadd.f32 %v1183, %v1343
    %v1345 = vpop.f32.mrb[0].mxu0
    %v1346 = vpop.f32.mrb[0].mxu0
    %v1347 = vadd.f32 %v1186, %v1346
    %v1348 = vpop.f32.mrb[0].mxu0
    %1349 = vmatprep.mubr.bf16.mxu0 %v800
    %1350 = vmatmul.mubr.bf16.gmra.mrb[0].mxu0 %v799
    %v1351 = vpop.f32.mrb[0].mxu0
    %v1352 = vadd.f32 %v1191, %v1351
    %v1353 = vpop.f32.mrb[0].mxu0
    %v1354 = vpop.f32.mrb[0].mxu0
    %v1355 = vadd.f32 %v1194, %v1354
    %v1356 = vpop.f32.mrb[0].mxu0
    %1357 = vmatprep.mubr.bf16.mxu0 %v804
    %1358 = vmatmul.mubr.bf16.gmra.mrb[0].mxu0 %v803
    %v1359 = vpop.f32.mrb[0].mxu0
    %v1360 = vadd.f32 %v1199, %v1359
    %v1361 = vpop.f32.mrb[0].mxu0
    %v1362 = vpop.f32.mrb[0].mxu0
    %v1363 = vadd.f32 %v1202, %v1362
    %v1364 = vpop.f32.mrb[0].mxu0
    %1365 = vmatprep.mubr.bf16.mxu0 %v808
    %1366 = vmatmul.mubr.bf16.gmra.mrb[0].mxu0 %v807
    %v1367 = vpop.f32.mrb[0].mxu0
    %v1368 = vadd.f32 %v1207, %v1367
    %v1369 = vpop.f32.mrb[0].mxu0
    %v1370 = vpop.f32.mrb[0].mxu0
    %v1371 = vadd.f32 %v1210, %v1370
    %v1372 = vpop.f32.mrb[0].mxu0
    %1373 = vmatprep.mubr.bf16.mxu0 %v812
    %1374 = vmatmul.mubr.bf16.gmra.mrb[0].mxu0 %v811
    %v1375 = vpop.f32.mrb[0].mxu0
    %v1376 = vadd.f32 %v1215, %v1375
    %v1377 = vpop.f32.mrb[0].mxu0
    %v1378 = vpop.f32.mrb[0].mxu0
    %v1379 = vadd.f32 %v1218, %v1378
    %v1380 = vpop.f32.mrb[0].mxu0
    %1381 = vmatprep.mubr.bf16.mxu0 %v816
    %1382 = vmatmul.mubr.bf16.gmra.mrb[0].mxu0 %v815
    %v1383 = vpop.f32.mrb[0].mxu0
    %v1384 = vadd.f32 %v1223, %v1383
    %v1385 = vpop.f32.mrb[0].mxu0
    %v1386 = vpop.f32.mrb[0].mxu0
    %v1387 = vadd.f32 %v1226, %v1386
    %v1388 = vpop.f32.mrb[0].mxu0
    %1389 = vmatprep.mubr.bf16.mxu0 %v820
    %1390 = vmatmul.mubr.bf16.gmra.mrb[0].mxu0 %v819
    %v1391 = vpop.f32.mrb[0].mxu0
    %v1392 = vadd.f32 %v1231, %v1391
    %v1393 = vpop.f32.mrb[0].mxu0
    %v1394 = vpop.f32.mrb[0].mxu0
    %v1395 = vadd.f32 %v1234, %v1394
    %v1396 = vpop.f32.mrb[0].mxu0
    %1397 = vmatprep.mubr.bf16.mxu0 %v824
    %1398 = vmatmul.mubr.bf16.gmra.mrb[0].mxu0 %v823
    %v1399 = vpop.f32.mrb[0].mxu0
    %v1400 = vadd.f32 %v1239, %v1399
    %v1401 = vpop.f32.mrb[0].mxu0
    %v1402 = vpop.f32.mrb[0].mxu0
    %v1403 = vadd.f32 %v1242, %v1402
    %v1404 = vpop.f32.mrb[0].mxu0
    %1405 = vmatprep.mubr.bf16.mxu0 %v828
    %1406 = vmatmul.mubr.bf16.gmra.mrb[0].mxu0 %v827
    %v1407 = vpop.f32.mrb[0].mxu0
    %v1408 = vadd.f32 %v1247, %v1407
    %v1409 = vpop.f32.mrb[0].mxu0
    %v1410 = vpop.f32.mrb[0].mxu0
    %v1411 = vadd.f32 %v1250, %v1410
    %v1412 = vpop.f32.mrb[0].mxu0
    %1413 = vdwg.mxu0
    %v1414 = vmax.f32 %v1288, 0.0
    %v1415 = vmax.f32 %v1291, 0.0
    %v1416 = vmax.f32 %v1296, 0.0
    %v1417 = vmax.f32 %v1299, 0.0
    %v1418 = vmax.f32 %v1304, 0.0
    %v1419 = vmax.f32 %v1307, 0.0
    %v1420 = vmax.f32 %v1312, 0.0
    %v1421 = vmax.f32 %v1315, 0.0
    %v1422 = vmax.f32 %v1320, 0.0
    %v1423 = vmax.f32 %v1323, 0.0
    %v1424 = vmax.f32 %v1328, 0.0
    %v1425 = vmax.f32 %v1331, 0.0
    %v1426 = vmax.f32 %v1336, 0.0
    %v1427 = vmax.f32 %v1339, 0.0
    %v1428 = vmax.f32 %v1344, 0.0
    %v1429 = vmax.f32 %v1347, 0.0
    %v1430 = vmax.f32 %v1352, 0.0
    %v1431 = vmax.f32 %v1355, 0.0
    %v1432 = vmax.f32 %v1360, 0.0
    %v1433 = vmax.f32 %v1363, 0.0
    %v1434 = vmax.f32 %v1368, 0.0
    %v1435 = vmax.f32 %v1371, 0.0
    %v1436 = vmax.f32 %v1376, 0.0
    %v1437 = vmax.f32 %v1379, 0.0
    %v1438 = vmax.f32 %v1384, 0.0
    %v1439 = vmax.f32 %v1387, 0.0
    %v1440 = vmax.f32 %v1392, 0.0
    %v1441 = vmax.f32 %v1395, 0.0
    %v1442 = vmax.f32 %v1400, 0.0
    %v1443 = vmax.f32 %v1403, 0.0
    %v1444 = vmax.f32 %v1408, 0.0
    %v1445 = vmax.f32 %v1411, 0.0
    %v1446 = vpack.c.bf16 %v1415, %v1414
    %v1447 = vpack.c.bf16 %v1417, %v1416
    %v1448 = vpack.c.bf16 %v1419, %v1418
    %v1449 = vpack.c.bf16 %v1421, %v1420
    %v1450 = vpack.c.bf16 %v1423, %v1422
    %v1451 = vpack.c.bf16 %v1425, %v1424
    %v1452 = vpack.c.bf16 %v1427, %v1426
    %v1453 = vpack.c.bf16 %v1429, %v1428
    %v1454 = vpack.c.bf16 %v1431, %v1430
    %v1455 = vpack.c.bf16 %v1433, %v1432
    %v1456 = vpack.c.bf16 %v1435, %v1434
    %v1457 = vpack.c.bf16 %v1437, %v1436
    %v1458 = vpack.c.bf16 %v1439, %v1438
    %v1459 = vpack.c.bf16 %v1441, %v1440
    %v1460 = vpack.c.bf16 %v1443, %v1442
    %v1461 = vpack.c.bf16 %v1445, %v1444
    %v1462 = vld [vmem:[%s5] sm:$0xf]
    %v1463 = vld [vmem:[%s5 + $0x4] sm:$0xf]
    %v1464 = vld [vmem:[%s5 + $0x8] sm:$0xf]
    %v1465 = vld [vmem:[%s5 + $0xc] sm:$0xf]
    %v1466 = vld [vmem:[%s5 + $0x10] sm:$0xf]
    %v1467 = vld [vmem:[%s5 + $0x14] sm:$0xf]
    %v1468 = vld [vmem:[%s5 + $0x18] sm:$0xf]
    %v1469 = vld [vmem:[%s5 + $0x1c] sm:$0xf]
    %v1470 = vld [vmem:[%s5 + $0x20] sm:$0xf]
    %v1471 = vld [vmem:[%s5 + $0x24] sm:$0xf]
    %v1472 = vld [vmem:[%s5 + $0x28] sm:$0xf]
    %v1473 = vld [vmem:[%s5 + $0x2c] sm:$0xf]
    %v1474 = vld [vmem:[%s5 + $0x30] sm:$0xf]
    %v1475 = vld [vmem:[%s5 + $0x34] sm:$0xf]
    %v1476 = vld [vmem:[%s5 + $0x38] sm:$0xf]
    %v1477 = vld [vmem:[%s5 + $0x3c] sm:$0xf]
    %v1478 = vld [vmem:[%s6] sm:$0x1]
    %v1480 = vlaneseq
    %v1481 = vshrl.u32 %v1480, 7
    %v1482 = vsub.s32 0, %v1481
    %v1483 = vrot.slane %v1478, %v1482
    %v1501 = vunpack.c.l.b16 %v1462
    %v1502 = vunpack.c.l.b16 %v1463
    %v1503 = vunpack.c.l.b16 %v1464
    %v1504 = vunpack.c.l.b16 %v1465
    %v1505 = vunpack.c.l.b16 %v1466
    %v1506 = vunpack.c.l.b16 %v1467
    %v1507 = vunpack.c.l.b16 %v1468
    %v1508 = vunpack.c.l.b16 %v1469
    %v1509 = vunpack.c.l.b16 %v1470
    %v1510 = vunpack.c.l.b16 %v1471
    %v1511 = vunpack.c.l.b16 %v1472
    %v1512 = vunpack.c.l.b16 %v1473
    %v1513 = vunpack.c.l.b16 %v1474
    %v1514 = vunpack.c.l.b16 %v1475
    %v1515 = vunpack.c.l.b16 %v1476
    %v1516 = vunpack.c.l.b16 %v1477
    %v1517 = vpack.c.b16 %v1502, %v1501
    %v1518 = vpack.c.b16 %v1504, %v1503
    %v1519 = vpack.c.b16 %v1506, %v1505
    %v1520 = vpack.c.b16 %v1508, %v1507
    %v1521 = vpack.c.b16 %v1510, %v1509
    %v1522 = vpack.c.b16 %v1512, %v1511
    %v1523 = vpack.c.b16 %v1514, %v1513
    %v1524 = vpack.c.b16 %v1516, %v1515
    %1533 = vmatprep.subr.bf16.mxu0 0
    %1534 = vmatpush1.bf16.msra.mxu0 %v1517
    %1535 = vmatprep.subr.bf16.mxu0 0
    %1536 = vmatpush1.bf16.msra.mxu0 %v1518
    %1537 = vmatprep.subr.bf16.mxu0 0
    %1538 = vmatpush1.bf16.msra.mxu0 %v1519
    %1539 = vmatprep.subr.bf16.mxu0 0
    %1540 = vmatpush1.bf16.msra.mxu0 %v1520
    %1541 = vmatprep.subr.bf16.mxu0 0
    %1542 = vmatpush1.bf16.msra.mxu0 %v1521
    %1543 = vmatprep.subr.bf16.mxu0 0
    %1544 = vmatpush1.bf16.msra.mxu0 %v1522
    %1545 = vmatprep.subr.bf16.mxu0 0
    %1546 = vmatpush1.bf16.msra.mxu0 %v1523
    %1547 = vmatprep.subr.bf16.mxu0 0
    %1548 = vmatpush1.bf16.msra.mxu0 %v1524
    %1549 = vmatprep.subr.bf16.mxu0 0
    %1550 = vmatpush1.bf16.msra.mxu0 0
    %1551 = vmatprep.subr.bf16.mxu0 0
    %1552 = vmatpush1.bf16.msra.mxu0 0
    %1553 = vmatprep.subr.bf16.mxu0 0
    %1554 = vmatpush1.bf16.msra.mxu0 0
    %1555 = vmatprep.subr.bf16.mxu0 0
    %1556 = vmatpush1.bf16.msra.mxu0 0
    %1557 = vmatprep.subr.bf16.mxu0 0
    %1558 = vmatpush1.bf16.msra.mxu0 0
    %1559 = vmatprep.subr.bf16.mxu0 0
    %1560 = vmatpush1.bf16.msra.mxu0 0
    %1561 = vmatprep.subr.bf16.mxu0 0
    %1562 = vmatpush1.bf16.msra.mxu0 0
    %1563 = vmatprep.subr.bf16.mxu0 0
    %1564 = vmatpush1.bf16.msra.mxu0 0
    %1565 = vmatprep.mubr.bf16.mxu0 0
    %1566 = vmatmul.mubr.bf16.gmra.mrb[0].mxu0 %v1446
    %v1567 = vpop.f32.mrb[0].mxu0
    %v1568 = vadd.f32 %v1483, %v1567
    %v1569 = vpop.f32.mrb[0].mxu0
    %v1570 = vpop.f32.mrb[0].mxu0
    %v1571 = vadd.f32 %v1483, %v1570
    %v1572 = vpop.f32.mrb[0].mxu0
    %1573 = vmatprep.mubr.bf16.mxu0 0
    %1574 = vmatmul.mubr.bf16.gmra.mrb[0].mxu0 %v1447
    %v1575 = vpop.f32.mrb[0].mxu0
    %v1576 = vadd.f32 %v1483, %v1575
    %v1577 = vpop.f32.mrb[0].mxu0
    %v1578 = vpop.f32.mrb[0].mxu0
    %v1579 = vadd.f32 %v1483, %v1578
    %v1580 = vpop.f32.mrb[0].mxu0
    %1581 = vmatprep.mubr.bf16.mxu0 0
    %1582 = vmatmul.mubr.bf16.gmra.mrb[0].mxu0 %v1448
    %v1583 = vpop.f32.mrb[0].mxu0
    %v1584 = vadd.f32 %v1483, %v1583
    %v1585 = vpop.f32.mrb[0].mxu0
    %v1586 = vpop.f32.mrb[0].mxu0
    %v1587 = vadd.f32 %v1483, %v1586
    %v1588 = vpop.f32.mrb[0].mxu0
    %1589 = vmatprep.mubr.bf16.mxu0 0
    %1590 = vmatmul.mubr.bf16.gmra.mrb[0].mxu0 %v1449
    %v1591 = vpop.f32.mrb[0].mxu0
    %v1592 = vadd.f32 %v1483, %v1591
    %v1593 = vpop.f32.mrb[0].mxu0
    %v1594 = vpop.f32.mrb[0].mxu0
    %v1595 = vadd.f32 %v1483, %v1594
    %v1596 = vpop.f32.mrb[0].mxu0
    %1597 = vmatprep.mubr.bf16.mxu0 0
    %1598 = vmatmul.mubr.bf16.gmra.mrb[0].mxu0 %v1450
    %v1599 = vpop.f32.mrb[0].mxu0
    %v1600 = vadd.f32 %v1483, %v1599
    %v1601 = vpop.f32.mrb[0].mxu0
    %v1602 = vpop.f32.mrb[0].mxu0
    %v1603 = vadd.f32 %v1483, %v1602
    %v1604 = vpop.f32.mrb[0].mxu0
    %1605 = vmatprep.mubr.bf16.mxu0 0
    %1606 = vmatmul.mubr.bf16.gmra.mrb[0].mxu0 %v1451
    %v1607 = vpop.f32.mrb[0].mxu0
    %v1608 = vadd.f32 %v1483, %v1607
    %v1609 = vpop.f32.mrb[0].mxu0
    %v1610 = vpop.f32.mrb[0].mxu0
    %v1611 = vadd.f32 %v1483, %v1610
    %v1612 = vpop.f32.mrb[0].mxu0
    %1613 = vmatprep.mubr.bf16.mxu0 0
    %1614 = vmatmul.mubr.bf16.gmra.mrb[0].mxu0 %v1452
    %v1615 = vpop.f32.mrb[0].mxu0
    %v1616 = vadd.f32 %v1483, %v1615
    %v1617 = vpop.f32.mrb[0].mxu0
    %v1618 = vpop.f32.mrb[0].mxu0
    %v1619 = vadd.f32 %v1483, %v1618
    %v1620 = vpop.f32.mrb[0].mxu0
    %1621 = vmatprep.mubr.bf16.mxu0 0
    %1622 = vmatmul.mubr.bf16.gmra.mrb[0].mxu0 %v1453
    %v1623 = vpop.f32.mrb[0].mxu0
    %v1624 = vadd.f32 %v1483, %v1623
    %v1625 = vpop.f32.mrb[0].mxu0
    %v1626 = vpop.f32.mrb[0].mxu0
    %v1627 = vadd.f32 %v1483, %v1626
    %v1628 = vpop.f32.mrb[0].mxu0
    %1629 = vmatprep.mubr.bf16.mxu0 0
    %1630 = vmatmul.mubr.bf16.gmra.mrb[0].mxu0 %v1454
    %v1631 = vpop.f32.mrb[0].mxu0
    %v1632 = vadd.f32 %v1483, %v1631
    %v1633 = vpop.f32.mrb[0].mxu0
    %v1634 = vpop.f32.mrb[0].mxu0
    %v1635 = vadd.f32 %v1483, %v1634
    %v1636 = vpop.f32.mrb[0].mxu0
    %1637 = vmatprep.mubr.bf16.mxu0 0
    %1638 = vmatmul.mubr.bf16.gmra.mrb[0].mxu0 %v1455
    %v1639 = vpop.f32.mrb[0].mxu0
    %v1640 = vadd.f32 %v1483, %v1639
    %v1641 = vpop.f32.mrb[0].mxu0
    %v1642 = vpop.f32.mrb[0].mxu0
    %v1643 = vadd.f32 %v1483, %v1642
    %v1644 = vpop.f32.mrb[0].mxu0
    %1645 = vmatprep.mubr.bf16.mxu0 0
    %1646 = vmatmul.mubr.bf16.gmra.mrb[0].mxu0 %v1456
    %v1647 = vpop.f32.mrb[0].mxu0
    %v1648 = vadd.f32 %v1483, %v1647
    %v1649 = vpop.f32.mrb[0].mxu0
    %v1650 = vpop.f32.mrb[0].mxu0
    %v1651 = vadd.f32 %v1483, %v1650
    %v1652 = vpop.f32.mrb[0].mxu0
    %1653 = vmatprep.mubr.bf16.mxu0 0
    %1654 = vmatmul.mubr.bf16.gmra.mrb[0].mxu0 %v1457
    %v1655 = vpop.f32.mrb[0].mxu0
    %v1656 = vadd.f32 %v1483, %v1655
    %v1657 = vpop.f32.mrb[0].mxu0
    %v1658 = vpop.f32.mrb[0].mxu0
    %v1659 = vadd.f32 %v1483, %v1658
    %v1660 = vpop.f32.mrb[0].mxu0
    %1661 = vmatprep.mubr.bf16.mxu0 0
    %1662 = vmatmul.mubr.bf16.gmra.mrb[0].mxu0 %v1458
    %v1663 = vpop.f32.mrb[0].mxu0
    %v1664 = vadd.f32 %v1483, %v1663
    %v1665 = vpop.f32.mrb[0].mxu0
    %v1666 = vpop.f32.mrb[0].mxu0
    %v1667 = vadd.f32 %v1483, %v1666
    %v1668 = vpop.f32.mrb[0].mxu0
    %1669 = vmatprep.mubr.bf16.mxu0 0
    %1670 = vmatmul.mubr.bf16.gmra.mrb[0].mxu0 %v1459
    %v1671 = vpop.f32.mrb[0].mxu0
    %v1672 = vadd.f32 %v1483, %v1671
    %v1673 = vpop.f32.mrb[0].mxu0
    %v1674 = vpop.f32.mrb[0].mxu0
    %v1675 = vadd.f32 %v1483, %v1674
    %v1676 = vpop.f32.mrb[0].mxu0
    %1677 = vmatprep.mubr.bf16.mxu0 0
    %1678 = vmatmul.mubr.bf16.gmra.mrb[0].mxu0 %v1460
    %v1679 = vpop.f32.mrb[0].mxu0
    %v1680 = vadd.f32 %v1483, %v1679
    %v1681 = vpop.f32.mrb[0].mxu0
    %v1682 = vpop.f32.mrb[0].mxu0
    %v1683 = vadd.f32 %v1483, %v1682
    %v1684 = vpop.f32.mrb[0].mxu0
    %1685 = vmatprep.mubr.bf16.mxu0 0
    %1686 = vmatmul.mubr.bf16.gmra.mrb[0].mxu0 %v1461
    %v1687 = vpop.f32.mrb[0].mxu0
    %v1688 = vadd.f32 %v1483, %v1687
    %v1689 = vpop.f32.mrb[0].mxu0
    %v1690 = vpop.f32.mrb[0].mxu0
    %v1691 = vadd.f32 %v1483, %v1690
    %v1692 = vpop.f32.mrb[0].mxu0
    %1693 = vdwg.mxu0
    %v1694 = vmax.f32 %v1568, 0.0
    %v1695 = vmax.f32 %v1571, 0.0
    %v1696 = vmax.f32 %v1576, 0.0
    %v1697 = vmax.f32 %v1579, 0.0
    %v1698 = vmax.f32 %v1584, 0.0
    %v1699 = vmax.f32 %v1587, 0.0
    %v1700 = vmax.f32 %v1592, 0.0
    %v1701 = vmax.f32 %v1595, 0.0
    %v1702 = vmax.f32 %v1600, 0.0
    %v1703 = vmax.f32 %v1603, 0.0
    %v1704 = vmax.f32 %v1608, 0.0
    %v1705 = vmax.f32 %v1611, 0.0
    %v1706 = vmax.f32 %v1616, 0.0
    %v1707 = vmax.f32 %v1619, 0.0
    %v1708 = vmax.f32 %v1624, 0.0
    %v1709 = vmax.f32 %v1627, 0.0
    %v1710 = vmax.f32 %v1632, 0.0
    %v1711 = vmax.f32 %v1635, 0.0
    %v1712 = vmax.f32 %v1640, 0.0
    %v1713 = vmax.f32 %v1643, 0.0
    %v1714 = vmax.f32 %v1648, 0.0
    %v1715 = vmax.f32 %v1651, 0.0
    %v1716 = vmax.f32 %v1656, 0.0
    %v1717 = vmax.f32 %v1659, 0.0
    %v1718 = vmax.f32 %v1664, 0.0
    %v1719 = vmax.f32 %v1667, 0.0
    %v1720 = vmax.f32 %v1672, 0.0
    %v1721 = vmax.f32 %v1675, 0.0
    %v1722 = vmax.f32 %v1680, 0.0
    %v1723 = vmax.f32 %v1683, 0.0
    %v1724 = vmax.f32 %v1688, 0.0
    %v1725 = vmax.f32 %v1691, 0.0
    %v1726 = vld [vmem:[%s7] sm:$0x1]
    %v1727 = vld [vmem:[#allocation2] sm:$0x1]
    %1729 = vset.pattern.permute.xlu0 0
    %1730 = vperm.xlu0 %1729, %v1727
    %v1731 = vpop.permute.xlu0 %1730
    %v1733 = vlaneseq
    %v1734 = vshrl.u32 %v1733, 7
    %v1735 = vsub.s32 0, %v1734
    %v1736 = vrot.slane %v1731, %v1735
    %vm1737 = vcmask 261120
    %v1739 = vsel %vm1737, %v1726, 0
    %v1742 = vsel %vm1737, %v1694, 0
    %v1745 = vsel %vm1737, %v1695, 0
    %v1748 = vsel %vm1737, %v1696, 0
    %v1751 = vsel %vm1737, %v1697, 0
    %v1754 = vsel %vm1737, %v1698, 0
    %v1757 = vsel %vm1737, %v1699, 0
    %v1760 = vsel %vm1737, %v1700, 0
    %v1763 = vsel %vm1737, %v1701, 0
    %v1766 = vsel %vm1737, %v1702, 0
    %v1769 = vsel %vm1737, %v1703, 0
    %v1772 = vsel %vm1737, %v1704, 0
    %v1775 = vsel %vm1737, %v1705, 0
    %v1778 = vsel %vm1737, %v1706, 0
    %v1781 = vsel %vm1737, %v1707, 0
    %v1784 = vsel %vm1737, %v1708, 0
    %v1787 = vsel %vm1737, %v1709, 0
    %v1790 = vsel %vm1737, %v1710, 0
    %v1793 = vsel %vm1737, %v1711, 0
    %v1796 = vsel %vm1737, %v1712, 0
    %v1799 = vsel %vm1737, %v1713, 0
    %v1802 = vsel %vm1737, %v1714, 0
    %v1805 = vsel %vm1737, %v1715, 0
    %v1808 = vsel %vm1737, %v1716, 0
    %v1811 = vsel %vm1737, %v1717, 0
    %v1814 = vsel %vm1737, %v1718, 0
    %v1817 = vsel %vm1737, %v1719, 0
    %v1820 = vsel %vm1737, %v1720, 0
    %v1823 = vsel %vm1737, %v1721, 0
    %v1826 = vsel %vm1737, %v1722, 0
    %v1829 = vsel %vm1737, %v1723, 0
    %v1832 = vsel %vm1737, %v1724, 0
    %v1835 = vsel %vm1737, %v1725, 0
    %1837 = vmatprep.subr.mxu0 0.0
    %1838 = vmatpush1.xpose.msra.mxu0 %v1742
    %1839 = vmatprep.subr.mxu0 0.0
    %1840 = vmatpush1.xpose.msra.mxu0 %v1745
    %1841 = vmatprep.subr.mxu0 0.0
    %1842 = vmatpush1.xpose.msra.mxu0 %v1748
    %1843 = vmatprep.subr.mxu0 0.0
    %1844 = vmatpush1.xpose.msra.mxu0 %v1751
    %1845 = vmatprep.subr.mxu0 0.0
    %1846 = vmatpush1.xpose.msra.mxu0 %v1754
    %1847 = vmatprep.subr.mxu0 0.0
    %1848 = vmatpush1.xpose.msra.mxu0 %v1757
    %1849 = vmatprep.subr.mxu0 0.0
    %1850 = vmatpush1.xpose.msra.mxu0 %v1760
    %1851 = vmatprep.subr.mxu0 0.0
    %1852 = vmatpush1.xpose.msra.mxu0 %v1763
    %1853 = vmatprep.subr.mxu0 0.0
    %1854 = vmatpush1.xpose.msra.mxu0 %v1766
    %1855 = vmatprep.subr.mxu0 0.0
    %1856 = vmatpush1.xpose.msra.mxu0 %v1769
    %1857 = vmatprep.subr.mxu0 0.0
    %1858 = vmatpush1.xpose.msra.mxu0 %v1772
    %1859 = vmatprep.subr.mxu0 0.0
    %1860 = vmatpush1.xpose.msra.mxu0 %v1775
    %1861 = vmatprep.subr.mxu0 0.0
    %1862 = vmatpush1.xpose.msra.mxu0 %v1778
    %1863 = vmatprep.subr.mxu0 0.0
    %1864 = vmatpush1.xpose.msra.mxu0 %v1781
    %1865 = vmatprep.subr.mxu0 0.0
    %1866 = vmatpush1.xpose.msra.mxu0 %v1784
    %1867 = vmatprep.subr.mxu0 0.0
    %1868 = vmatpush1.xpose.msra.mxu0 %v1787
    %1869 = vmatprep.subr.mxu0 0.0
    %1870 = vmatpush1.xpose.msra.mxu0 %v1790
    %1871 = vmatprep.subr.mxu0 0.0
    %1872 = vmatpush1.xpose.msra.mxu0 %v1793
    %1873 = vmatprep.subr.mxu0 0.0
    %1874 = vmatpush1.xpose.msra.mxu0 %v1796
    %1875 = vmatprep.subr.mxu0 0.0
    %1876 = vmatpush1.xpose.msra.mxu0 %v1799
    %1877 = vmatprep.subr.mxu0 0.0
    %1878 = vmatpush1.xpose.msra.mxu0 %v1802
    %1879 = vmatprep.subr.mxu0 0.0
    %1880 = vmatpush1.xpose.msra.mxu0 %v1805
    %1881 = vmatprep.subr.mxu0 0.0
    %1882 = vmatpush1.xpose.msra.mxu0 %v1808
    %1883 = vmatprep.subr.mxu0 0.0
    %1884 = vmatpush1.xpose.msra.mxu0 %v1811
    %1885 = vmatprep.subr.mxu0 0.0
    %1886 = vmatpush1.xpose.msra.mxu0 %v1814
    %1887 = vmatprep.subr.mxu0 0.0
    %1888 = vmatpush1.xpose.msra.mxu0 %v1817
    %1889 = vmatprep.subr.mxu0 0.0
    %1890 = vmatpush1.xpose.msra.mxu0 %v1820
    %1891 = vmatprep.subr.mxu0 0.0
    %1892 = vmatpush1.xpose.msra.mxu0 %v1823
    %1893 = vmatprep.subr.mxu0 0.0
    %1894 = vmatpush1.xpose.msra.mxu0 %v1826
    %1895 = vmatprep.subr.mxu0 0.0
    %1896 = vmatpush1.xpose.msra.mxu0 %v1829
    %1897 = vmatprep.subr.mxu0 0.0
    %1898 = vmatpush1.xpose.msra.mxu0 %v1832
    %1899 = vmatprep.subr.mxu0 0.0
    %1900 = vmatpush1.xpose.msra.mxu0 %v1835
    %1901 = vmatprep.mubr.f32.mxu0 0.0
    %1902 = vmatmul.mubr.f32.gmra.mrb[0].mxu0 %v1739
    %v1903 = vpop.f32.mrb[0].mxu0
    %v1904 = vadd.f32 %v1736, %v1903
    %v1905 = vpop.f32.mrb[0].mxu0
    %v1906 = vadd.f32 %v1736, %v1905
    %1907 = vdwg.mxu0
    %v1910 = vcombine.low %v1904, %v1906
    %v1912 = vunpack.c.l.s4 1966171168
    %v1913 = vunpack.c.0.s8 %v1912
    %v1914 = vlaneseq
    %v1915 = vshrl.u32 %v1914, 7
    %v1916 = vsub.s32 %v1913, %v1915
    %v1917 = vrot.slane %v1910, %v1916
    %v1919 = vunpack.c.l.s4 1966171168
    %v1920 = vunpack.c.0.s8 %v1919
    %v1921 = vlaneseq
    %v1922 = vshrl.u32 %v1921, 7
    %v1923 = vsub.s32 %v1920, %v1922
    %v1924 = vrot.slane %v1917, %v1923
    %v1926 = vlaneseq
    %vm1927 = vcmp.ge.s32.totalorder %v1926, 0
    %vm1928 = vcmp.lt.s32.totalorder %v1926, 256
    %vm1929 = vmand %vm1927, %vm1928
    %1930 = vst.msk [vmem:[#allocation3] sm:$0x3] %vm1929, %v1924
    // Predicated region
    $region38: #{muon_classifier_forward.1} parent=1 // pred_check
      _
    $region39: #{muon_classifier_forward.1} parent=1 // pred_check_branch
      %1932 = sbr.rel (0) target = $region41
    $region40: #{muon_classifier_forward.1} parent=1 // pred_region
      %s1934 = ssub.s32 32, 32
      %1935 = vsyncadd [#allocation4], %s1934
      %s1937 = sshll.u32 [#allocation3], 4
      %s1938 = int_to_ptr.vmem [resolvable:$true] %s1937
      %1940 = dma.vmem_to_hbm [thread:$0]  %s1938, 32, %s9, [#allocation4]
    $region41: #{muon_classifier_forward.1} parent=1 // pred_fallthru
      _
    // Predicated region
    $region42: #{muon_classifier_forward.1} parent=1 // pred_check
      _
    $region43: #{muon_classifier_forward.1} parent=1 // pred_check_branch
      %1942 = sbr.rel (0) target = $region45
    $region44: #{muon_classifier_forward.1} parent=1 // pred_region
      %1943 = dma.done [#allocation4], 32
    $region45: #{muon_classifier_forward.1} parent=1 // pred_fallthru
      _
    %1944 = vsyncpa [#allocation4], 1

</llo_original>
